<compile_context>
chip_gen: v7x
topology: tpu7x:2x2x1
jax: 0.10.0
libtpu: 0.0.40
codegen_flags: <defaults>
</compile_context>

<pallas_src>
import functools
import math

import jax
import jax.numpy as jnp
from jax.experimental import pallas as pl
from jax.experimental.pallas import tpu as pltpu


def _round_up(x, m):
    return ((x + m - 1) // m) * m


def _padded_bytes(shape, elem_bytes=4):
    """Conservative VMEM footprint of one tile (lanes->128, sublanes->8)."""
    s = [int(d) for d in shape]
    s[-1] = _round_up(s[-1], 128)
    if len(s) >= 2:
        s[-2] = _round_up(s[-2], 8)
    n = 1
    for d in s:
        n *= d
    return n * elem_bytes


# ----------------------------- fused conv kernel -----------------------------

def _conv3x3_kernel(*refs, n_in, has_head, pool, act, th, w_eff, w_valid):
    """Fused 3x3 'same' conv for one (batch, row-tile) grid step.

    refs layout (inputs, outputs, scratch):
      inputs : x0_main, x0_halo, x1_main, x1_halo, ..., w_0..w_{n-1}, bias,
               (head_w, head_b)?
      outputs: out, (head_out)?
      scratch: slab_0 .. slab_{n-1}

      x*_main : (1, th, Wp, Ci)  th conv rows of the padded NHWC input, bf16
      x*_halo : (1, 2,  Wp, Ci)  2-row bottom halo for this tile, bf16
      w_i     : (9, Ci, Cout)    tap-major weights, bf16
      bias    : (1, Cout)        f32
      head_w  : (1, Cout), head_b : (1, 1)  fused 1x1 sigmoid head (f32, VPU)
      out     : (1, th, Wp-2, Cout)   (or (1, 1, Cout) when pool=True)
      slab_i  : (th+2, Wp, Ci)   VMEM scratch, bf16
    """
    x_main = refs[0:2 * n_in:2]
    x_halo = refs[1:2 * n_in:2]
    ws = refs[2 * n_in:3 * n_in]
    b_ref = refs[3 * n_in]
    pos = 3 * n_in + 1
    hw_ref = hb_ref = None
    if has_head:
        hw_ref, hb_ref = refs[pos], refs[pos + 1]
        pos += 2
    o_ref = refs[pos]
    h_ref = refs[pos + 1] if has_head else None
    pos += 2 if has_head else 1
    slabs = refs[pos:pos + n_in]

    m = th * w_eff
    cout = b_ref.shape[-1]
    acc = jnp.zeros((m, cout), jnp.float32)

    # 3x3 conv as 9 shifted bf16 matmuls per input, accumulated in f32.
    # The (th+2)-row halo slab is assembled once per tile in VMEM scratch and
    # loaded once; the ky/kx shifts are static register slices (no HBM
    # im2col, no overlapping re-loads, no f32 cast of the activations).
    # TODO(synk): fold the 9 taps (and both skip inputs) into the matmul K
    # dimension; at these channel counts the lane-dim concat needed to build
    # the (M, 9*sum(Ci)) operand costs more than the extra MXU pushes it saves.
    for xm, xh, w_ref, slab in zip(x_main, x_halo, ws, slabs):
        cin = w_ref.shape[1]
        slab[0:th, :, :] = xm[0]
        slab[th:th + 2, :, :] = xh[0]
        rows_all = slab[...]                          # (th+2, Wp, Ci) bf16
        for ky in range(3):
            rows = rows_all[ky:ky + th]
            for kx in range(3):
                win = rows[:, kx:kx + w_eff, :].reshape(m, cin)
                acc = acc + jnp.dot(win, w_ref[3 * ky + kx],
                                    preferred_element_type=jnp.float32)

    acc = acc + b_ref[...]
    if act == "relu":
        acc = jnp.maximum(acc, 0.0)
    elif act == "sigmoid":
        acc = jax.nn.sigmoid(acc)

    if pool:
        # fused global average pool over the valid spatial positions
        # (pool forces th == H, so the mean is global, never per-tile)
        col = jax.lax.broadcasted_iota(jnp.int32, (m, 1), 0) % w_eff
        acc = jnp.where(col < w_valid, acc, 0.0)
        o_ref[0] = (jnp.sum(acc, axis=0, keepdims=True)
                    * (1.0 / float(th * w_valid))).astype(o_ref.dtype)
    else:
        # TODO(synk): lane-dense (1, th, w_eff*cout) output packing requires a
        # sublane->lane relayout of the accumulator; left as a follow-up.
        o_ref[0] = acc.reshape(th, w_eff, cout).astype(o_ref.dtype)
        if has_head:
            # 1-channel 1x1 sigmoid head on the VPU (broadcast-mul + lane
            # reduce) -- no N=1 MXU matmul, reads the f32 accumulator.
            hv = jnp.sum(acc * hw_ref[...], axis=-1, keepdims=True)
            hv = jax.nn.sigmoid(hv + hb_ref[...])
            h_ref[0] = hv.reshape(th, w_eff, 1).astype(h_ref.dtype)


def conv3x3(xs, ws, bias, *, act="none", head=None, pool=False,
            out_dtype=jnp.bfloat16):
    """Fused 3x3 'same' conv (multi-input skip concat / fused head / fused GAP).

    xs   : list of NHWC inputs (same B, H, W; channel counts may differ)
    ws   : list of prepared (9, Ci, Cout) bf16 tap-major weights (shared Cout)
    bias : (1, Cout) f32
    head : optional (hw (1, Cout) f32, hb (1, 1) f32) -> sigmoid 1x1 head
    pool : fuse a global average pool; returns (B, Cout) instead of a map
    """
    assert not (pool and head is not None)
    B, H, W, _ = xs[0].shape
    cout = ws[0].shape[-1]
    w_eff = _round_up(W, 16)               # bf16 sublane-tile friendly width
    th = 8 if (H % 8 == 0) else H
    if pool:
        th = H
    assert H % th == 0 and th % 2 == 0
    n_t = H // th
    hb_idx = th // 2                        # halo block-index stride (2-row blocks)

    ins, in_specs, scratch = [], [], []
    vmem_bytes = 4 * 1024 * 1024            # slack for compiler-internal scratch
    for x in xs:
        ci = x.shape[-1]
        # TODO(synk): handle the 'same' border in-kernel (or write into
        # pre-padded buffers) so this per-layer HBM pad copy disappears.
        xp = jnp.pad(x.astype(jnp.bfloat16),
                     ((0, 0), (1, 1), (1, 1 + (w_eff - W)), (0, 0)))
        # Halo row-tiling: a th-row main block plus a 2-row bottom-halo block
        # (same padded array passed twice).  Bounded per-step VMEM (v7x-safe),
        # auto-pipelined, and both grid axes stay megacore-parallel.
        ins.append(xp)
        in_specs.append(pl.BlockSpec((1, th, w_eff + 2, ci),
                                     lambda b, t: (b, t, 0, 0)))
        ins.append(xp)
        in_specs.append(pl.BlockSpec((1, 2, w_eff + 2, ci),
                                     lambda b, t: (b, (t + 1) * hb_idx, 0, 0)))
        scratch.append(pltpu.VMEM((th + 2, w_eff + 2, ci), jnp.bfloat16))
        vmem_bytes += 2 * _padded_bytes((1, th, w_eff + 2, ci))
        vmem_bytes += 2 * _padded_bytes((1, 2, w_eff + 2, ci))
        vmem_bytes += _padded_bytes((th + 2, w_eff + 2, ci))
    for w in ws:
        ci = w.shape[1]
        ins.append(w)
        in_specs.append(pl.BlockSpec((9, ci, cout), lambda b, t: (0, 0, 0)))
        vmem_bytes += 2 * _padded_bytes((9, ci, cout))
    ins.append(bias)
    in_specs.append(pl.BlockSpec((1, cout), lambda b, t: (0, 0)))
    vmem_bytes += 2 * _padded_bytes((1, cout))

    has_head = head is not None
    if has_head:
        hw, hb = head
        ins.append(hw)
        in_specs.append(pl.BlockSpec((1, cout), lambda b, t: (0, 0)))
        ins.append(hb)
        in_specs.append(pl.BlockSpec((1, 1), lambda b, t: (0, 0)))
        vmem_bytes += 2 * (_padded_bytes((1, cout)) + _padded_bytes((1, 1)))

    if pool:
        out_shape = [jax.ShapeDtypeStruct((B, 1, cout), jnp.float32)]
        out_specs = [pl.BlockSpec((1, 1, cout), lambda b, t: (b, 0, 0))]
        vmem_bytes += 2 * _padded_bytes((1, 1, cout))
    else:
        out_shape = [jax.ShapeDtypeStruct((B, H, w_eff, cout), out_dtype)]
        out_specs = [pl.BlockSpec((1, th, w_eff, cout),
                                  lambda b, t: (b, t, 0, 0))]
        vmem_bytes += 2 * _padded_bytes((1, th, w_eff, cout))
        if has_head:
            out_shape.append(
                jax.ShapeDtypeStruct((B, H, w_eff, 1), jnp.float32))
            out_specs.append(pl.BlockSpec((1, th, w_eff, 1),
                                          lambda b, t: (b, t, 0, 0)))
            vmem_bytes += 2 * _padded_bytes((1, th, w_eff, 1))

    # scoped-VMEM request from the tiled footprint (never below the default)
    vmem_limit = min(max(vmem_bytes, 32 * 1024 * 1024), 96 * 1024 * 1024)

    kernel = functools.partial(
        _conv3x3_kernel, n_in=len(xs), has_head=has_head, pool=pool,
        act=act, th=th, w_eff=w_eff, w_valid=W)

    outs = pl.pallas_call(
        kernel,
        out_shape=out_shape,
        grid=(B, n_t),
        in_specs=in_specs,
        out_specs=out_specs,
        scratch_shapes=scratch,
        compiler_params=pltpu.CompilerParams(
            dimension_semantics=("parallel", "parallel"),
            vmem_limit_bytes=vmem_limit),
    )(*ins)

    if pool:
        return outs[0][:, 0, :]                       # (B, Cout) f32
    y = outs[0][:, :, :W, :]                          # trim width padding
    if has_head:
        return y, outs[1][:, :, :W, :]
    return y


# ------------------------------- layout glue --------------------------------

def nchw_to_nhwc(x):
    return jnp.transpose(x, (0, 2, 3, 1))


def nhwc_to_nchw(x):
    return jnp.transpose(x, (0, 3, 1, 2))


# TODO(synk): fold the nearest-neighbor 2x upsample into the consuming conv's
# read path (low-res halo blocks + in-kernel replication) to avoid the 4x
# HBM inflation of decoder activations.
def upsample2(x):    # nearest-neighbor 2x (NHWC)
    return jnp.repeat(jnp.repeat(x, 2, axis=1), 2, axis=2)


# TODO(synk): fuse the stride-2 subsample into the consuming conv as a
# strided read instead of materializing the half-res copy.
def downsample2(x):  # stride-2 subsample (NHWC)
    return x[:, ::2, ::2, :]


# ----------------- pose-matrix math (monodepth2 layers.py) ------------------
# TODO(synk): per-sample 4x4 matrix assembly kept in plain JAX (scalar-scale
# work, no meaningful Pallas hot path).

def rot_from_axisangle(vec):
    """vec: (B, 1, 3) -> (B, 4, 4) rotation matrix."""
    angle = jnp.linalg.norm(vec, axis=2, keepdims=True)        # (B,1,1)
    axis = vec / (angle + 1e-7)
    ca = jnp.cos(angle)[:, 0, 0]
    sa = jnp.sin(angle)[:, 0, 0]
    C = 1.0 - ca
    x = axis[:, 0, 0]
    y = axis[:, 0, 1]
    z = axis[:, 0, 2]
    xs, ys, zs = x * sa, y * sa, z * sa
    xC, yC, zC = x * C, y * C, z * C
    xyC, yzC, zxC = x * yC, y * zC, z * xC
    zeros = jnp.zeros_like(x)
    ones = jnp.ones_like(x)
    rot = jnp.stack([
        jnp.stack([x * xC + ca, xyC - zs, zxC + ys, zeros], axis=-1),
        jnp.stack([xyC + zs, y * yC + ca, yzC - xs, zeros], axis=-1),
        jnp.stack([zxC - ys, yzC + xs, z * zC + ca, zeros], axis=-1),
        jnp.stack([zeros, zeros, zeros, ones], axis=-1),
    ], axis=1)
    return rot


def get_translation_matrix(t):
    """t: (B, 1, 3) -> (B, 4, 4)."""
    B = t.shape[0]
    T = jnp.tile(jnp.eye(4, dtype=t.dtype)[None], (B, 1, 1))
    return T.at[:, :3, 3].set(t.reshape(B, 3))


def transformation_from_parameters(axisangle, translation, invert=False):
    R = rot_from_axisangle(axisangle)
    t = translation
    if invert:
        R = jnp.transpose(R, (0, 2, 1))
        t = -t
    T = get_translation_matrix(t)
    return jnp.matmul(R, T) if invert else jnp.matmul(T, R)


# ------------------------------ model definition ----------------------------

C1, C2, C3 = 8, 16, 32            # encoder channels (3 scales)
NUM_CLASSES = 6                   # segmentation classes
POSE_C1, POSE_C2 = 8, 16          # pose encoder channels
NF_PRED = 2                       # num_frames_to_predict_for (monodepth2)


def init_params(key):
    """Deterministic synthetic parameter init (PyTorch-style raw layout)."""
    conv_specs = [
        ("enc1", 3, C1), ("enc2", C1, C2), ("enc3", C2, C3),
        ("dep3", C3, 16), ("dep2", 16 + C2, 16), ("dep1", 16 + C1, 8),
        ("seg_hid", C3, 16), ("seg_out", 16 + C1, NUM_CLASSES),
        ("pose_enc1", 6, POSE_C1), ("pose_enc2", POSE_C1, POSE_C2),
        ("pose_dec1", POSE_C2, 16), ("pose_dec2", 16, 6 * NF_PRED),
    ]
    # 1x1 sigmoid disparity heads (fused into the producing decoder kernel)
    head_specs = [("disp2", 16, 1), ("disp1", 16, 1), ("disp0", 8, 1)]
    params = {}
    for idx, (name, cin, cout) in enumerate(conv_specs):
        kw, kb = jax.random.split(jax.random.fold_in(key, idx))
        scale = 1.0 / math.sqrt(9.0 * cin)
        params[name + "_w"] = scale * jax.random.normal(
            kw, (3, 3, cin, cout), jnp.float32)
        params[name + "_b"] = 0.01 * jax.random.normal(kb, (cout,), jnp.float32)
    for idx, (name, cin, cout) in enumerate(head_specs):
        kw, kb = jax.random.split(jax.random.fold_in(key, 100 + idx))
        scale = 1.0 / math.sqrt(cin)
        params[name + "_w"] = scale * jax.random.normal(
            kw, (cin, cout), jnp.float32)
        params[name + "_b"] = 0.01 * jax.random.normal(kb, (cout,), jnp.float32)
    return params


def prepare_params(params):
    """Hoisted per-forward weight prep: tap-major bf16 weights, f32 biases,
    skip-concat weight splits and (1, C) VPU head rows are built once."""
    def w9(w):
        return jnp.asarray(w, jnp.bfloat16).reshape(9, w.shape[2], w.shape[3])

    def b1(b):
        return jnp.asarray(b, jnp.float32).reshape(1, -1)

    pp = {}
    for name in ["enc1", "enc2", "enc3", "dep3", "seg_hid",
                 "pose_enc1", "pose_enc2", "pose_dec1", "pose_dec2"]:
        pp[name] = ([w9(params[name + "_w"])], b1(params[name + "_b"]))
    for name, split in [("dep2", 16), ("dep1", 16), ("seg_out", 16)]:
        wa, wb = jnp.split(params[name + "_w"], [split], axis=2)
        pp[name] = ([w9(wa), w9(wb)], b1(params[name + "_b"]))
    for name in ["disp2", "disp1", "disp0"]:
        pp[name] = (jnp.asarray(params[name + "_w"], jnp.float32).reshape(1, -1),
                    jnp.asarray(params[name + "_b"], jnp.float32).reshape(1, 1))
    return pp


class JointSegmentationMonodepthPallas:
    """Mirrors JointSegmentationMonodepth.forward / predict_poses semantics."""

    def __init__(self, params, frame_ids, use_pose_net, num_pose_frames,
                 provide_uncropped_for_pose):
        self.pp = prepare_params(params)
        self.frame_ids = frame_ids
        self.use_pose_net = use_pose_net
        self.num_pose_frames = num_pose_frames
        self.provide_uncropped_for_pose = provide_uncropped_for_pose
        self.models = {"encoder", "depth", "segmentation", "pose_encoder", "pose"}

    # --- sub-models (all conv / reduction compute is inside Pallas) ---

    def encoder(self, x_nchw):
        p = self.pp
        x = nchw_to_nhwc(x_nchw)
        w, b = p["enc1"]
        f1 = conv3x3([x], w, b, act="relu")                        # H
        w, b = p["enc2"]
        f2 = conv3x3([downsample2(f1)], w, b, act="relu")          # H/2
        w, b = p["enc3"]
        f3 = conv3x3([downsample2(f2)], w, b, act="relu")          # H/4
        return [f1, f2, f3]                                        # NHWC bf16

    def depth(self, features):
        p = self.pp
        f1, f2, f3 = features
        out = {}
        # decoder conv + fused 1x1 sigmoid disp head (single kernel launch)
        w, b = p["dep3"]
        x, d2 = conv3x3([f3], w, b, act="relu", head=p["disp2"])
        out[("disp", 2)] = nhwc_to_nchw(d2)
        # fused skip-concat: two inputs, weight slabs split along concat axis
        w, b = p["dep2"]
        x, d1 = conv3x3([upsample2(x), f2], w, b, act="relu", head=p["disp1"])
        out[("disp", 1)] = nhwc_to_nchw(d1)
        w, b = p["dep1"]
        x, d0 = conv3x3([upsample2(x), f1], w, b, act="relu", head=p["disp0"])
        out[("disp", 0)] = nhwc_to_nchw(d0)
        return out

    def segmentation(self, features):
        p = self.pp
        f1, f2, f3 = features
        w, b = p["seg_hid"]
        x = conv3x3([f3], w, b, act="relu")
        w, b = p["seg_out"]
        logits = conv3x3([upsample2(upsample2(x)), f1], w, b,
                         act="none", out_dtype=jnp.float32)
        return nhwc_to_nchw(logits)                   # (B, NUM_CLASSES, H, W)

    def pose_encoder(self, x_nchw6):
        p = self.pp
        x = nchw_to_nhwc(x_nchw6)
        w, b = p["pose_enc1"]
        f = conv3x3([x], w, b, act="relu")
        w, b = p["pose_enc2"]
        f = conv3x3([downsample2(f)], w, b, act="relu")
        return [f]

    def pose(self, pose_inputs):
        p = self.pp
        feat = pose_inputs[0][-1]
        w, b = p["pose_dec1"]
        x = conv3x3([feat], w, b, act="relu")
        # final pose conv fused with the global average pool (one kernel)
        w, b = p["pose_dec2"]
        pooled = conv3x3([x], w, b, act="none", pool=True)          # (Bp, 12)
        out = 0.01 * pooled.reshape(-1, NF_PRED, 1, 6)
        return out[..., :3], out[..., 3:]

    # --- wrapper logic (matches the PyTorch module) ---

    def predict_poses(self, inputs, features):
        outputs = {}
        key = ("color_full_aug" if self.provide_uncropped_for_pose
               else "color_aug")
        if self.num_pose_frames == 2:
            pose_feats = {f_i: inputs[(key, f_i, 0)] for f_i in self.frame_ids}
            pair_ids = [f_i for f_i in self.frame_ids[1:] if f_i != "s"]
            if pair_ids:
                pairs = []
                for f_i in pair_ids:
                    if f_i < 0:
                        pairs.append(jnp.concatenate(
                            [pose_feats[f_i], pose_feats[0]], axis=1))
                    else:
                        pairs.append(jnp.concatenate(
                            [pose_feats[0], pose_feats[f_i]], axis=1))
                # batch all frame pairs through one pass of the pose network
                stacked = jnp.concatenate(pairs, axis=0)
                axisangle, translation = self.pose([self.pose_encoder(stacked)])
                B = pose_feats[0].shape[0]
                for n, f_i in enumerate(pair_ids):
                    aa = axisangle[n * B:(n + 1) * B]
                    tr = translation[n * B:(n + 1) * B]
                    outputs[("axisangle", 0, f_i)] = aa
                    outputs[("translation", 0, f_i)] = tr
                    outputs[("cam_T_cam", 0, f_i)] = \
                        transformation_from_parameters(
                            aa[:, 0], tr[:, 0], invert=(f_i < 0))
        else:
            pose_in = jnp.concatenate(
                [inputs[(key, i, 0)] for i in self.frame_ids if i != "s"],
                axis=1)
            axisangle, translation = self.pose([self.pose_encoder(pose_in)])
            for i, f_i in enumerate(self.frame_ids[1:]):
                if f_i != "s":
                    outputs[("axisangle", 0, f_i)] = axisangle
                    outputs[("translation", 0, f_i)] = translation
                    outputs[("cam_T_cam", 0, f_i)] = \
                        transformation_from_parameters(
                            axisangle[:, i], translation[:, i])
        return outputs

    def predict_test_disp(self, x):
        input_color = x[("color", 0, 0)]
        return self.depth(self.encoder(input_color))

    def forward(self, x):
        outputs = {}
        inputs = x
        features = self.encoder(inputs[("color_aug", 0, 0)])
        outputs["bottleneck"] = nhwc_to_nchw(features[-1]).astype(jnp.float32)
        if "mtl_decoder" in self.models:
            pass  # not instantiated in this synthetic configuration
        else:
            if "depth" in self.models:
                outputs.update(self.depth(features))
            if "segmentation" in self.models:
                outputs["semantics"] = self.segmentation(features)
        if "imnet_encoder" in self.models:
            outputs["encoder_features"] = \
                nhwc_to_nchw(features[-1]).astype(jnp.float32)
        if self.use_pose_net:
            outputs.update(self.predict_poses(inputs, features))
        return outputs


# ----------------------------------- main -----------------------------------

if __name__ == "__main__":
    key = jax.random.PRNGKey(0)
    k_in, k_par = jax.random.split(key)

    B, C, H, W = 2, 3, 16, 16
    frame_ids = [0, -1, 1]

    inputs = {}
    for i, f_i in enumerate(frame_ids):
        inputs[("color_aug", f_i, 0)] = jax.random.normal(
            jax.random.fold_in(k_in, i), (B, C, H, W), jnp.float32)

    params = init_params(k_par)
    model = JointSegmentationMonodepthPallas(
        params,
        frame_ids=frame_ids,
        use_pose_net=True,
        num_pose_frames=2,
        provide_uncropped_for_pose=False,
    )

    outputs = model.forward(inputs)

    # sanity: expected output set and shapes
    assert ("disp", 0) in outputs and "semantics" in outputs
    assert ("cam_T_cam", 0, -1) in outputs and ("cam_T_cam", 0, 1) in outputs
    assert outputs["bottleneck"].shape == (B, C3, H // 4, W // 4)
    assert outputs[("disp", 0)].shape == (B, 1, H, W)
    assert outputs[("disp", 1)].shape == (B, 1, H // 2, W // 2)
    assert outputs[("disp", 2)].shape == (B, 1, H // 4, W // 4)
    assert outputs["semantics"].shape == (B, NUM_CLASSES, H, W)
    assert outputs[("axisangle", 0, 1)].shape == (B, NF_PRED, 1, 3)
    assert outputs[("cam_T_cam", 0, 1)].shape == (B, 4, 4)

    for v in outputs.values():
        jax.block_until_ready(v)
    print("KERNEL_OK")
</pallas_src>

<mosaic_0001>
module attributes {stable_mosaic.version = 11 : i64} {
  func.func @_conv3x3_kernel(%arg0: i32, %arg1: i32, %arg2: memref<1x8x18x3xbf16, #tpu.memory_space<vmem>>, %arg3: memref<1x2x18x3xbf16, #tpu.memory_space<vmem>>, %arg4: memref<9x3x8xbf16, #tpu.memory_space<vmem>>, %arg5: memref<1x8xf32, #tpu.memory_space<vmem>>, %arg6: memref<1x8x16x8xbf16, #tpu.memory_space<vmem>>, %arg7: memref<10x18x3xbf16, #tpu.memory_space<vmem>>) attributes {dimension_semantics = [#tpu.dimension_semantics<parallel>, #tpu.dimension_semantics<parallel>], iteration_bounds = array<i64: 2, 2>, scalar_prefetch = 0 : i64, scratch_operands = 1 : i64, tpu.core_type = #tpu.core_type<tc>, window_params = [{transform_indices = @transform_0, window_bounds = array<i64: 1, 8, 18, 3>}, {transform_indices = @transform_1, window_bounds = array<i64: 1, 2, 18, 3>}, {pipeline_mode = #tpu.pipeline_mode<synchronous>, transform_indices = @transform_2, window_bounds = array<i64: 9, 3, 8>}, {pipeline_mode = #tpu.pipeline_mode<synchronous>, transform_indices = @transform_3, window_bounds = array<i64: 1, 8>}, {transform_indices = @transform_4, window_bounds = array<i64: 1, 8, 16, 8>}]} {
    %cst = arith.constant 0.000000e+00 : f32
    %0 = vector.broadcast %cst : f32 to vector<128x8xf32>
    %c0 = arith.constant 0 : index
    %c0_0 = arith.constant 0 : index
    %c0_1 = arith.constant 0 : index
    %c0_2 = arith.constant 0 : index
    %1 = vector.load %arg2[%c0, %c0_0, %c0_1, %c0_2] : memref<1x8x18x3xbf16, #tpu.memory_space<vmem>>, vector<1x8x18x3xbf16>
    %2 = vector.shape_cast %1 : vector<1x8x18x3xbf16> to vector<8x18x3xbf16>
    %c0_3 = arith.constant 0 : index
    %c0_4 = arith.constant 0 : index
    %c0_5 = arith.constant 0 : index
    %3 = vector.load %arg7[%c0_3, %c0_4, %c0_5] : memref<10x18x3xbf16, #tpu.memory_space<vmem>>, vector<8x18x3xbf16>
    tpu.vector_store %arg7[%c0_3, %c0_4, %c0_5], %2 {strides = array<i32>} : memref<10x18x3xbf16, #tpu.memory_space<vmem>>, vector<8x18x3xbf16>,
    %c0_6 = arith.constant 0 : index
    %c0_7 = arith.constant 0 : index
    %c0_8 = arith.constant 0 : index
    %c0_9 = arith.constant 0 : index
    %4 = vector.load %arg3[%c0_6, %c0_7, %c0_8, %c0_9] : memref<1x2x18x3xbf16, #tpu.memory_space<vmem>>, vector<1x2x18x3xbf16>
    %5 = vector.shape_cast %4 : vector<1x2x18x3xbf16> to vector<2x18x3xbf16>
    %c8 = arith.constant 8 : index
    %c0_10 = arith.constant 0 : index
    %c0_11 = arith.constant 0 : index
    %6 = vector.load %arg7[%c8, %c0_10, %c0_11] : memref<10x18x3xbf16, #tpu.memory_space<vmem>>, vector<2x18x3xbf16>
    tpu.vector_store %arg7[%c8, %c0_10, %c0_11], %5 {strides = array<i32>} : memref<10x18x3xbf16, #tpu.memory_space<vmem>>, vector<2x18x3xbf16>,
    %c0_12 = arith.constant 0 : index
    %c0_13 = arith.constant 0 : index
    %c0_14 = arith.constant 0 : index
    %7 = vector.load %arg7[%c0_12, %c0_13, %c0_14] : memref<10x18x3xbf16, #tpu.memory_space<vmem>>, vector<10x18x3xbf16>
    %8 = vector.extract_strided_slice %7 {offsets = [0, 0, 0], sizes = [8, 18, 3], strides = [1, 1, 1]} : vector<10x18x3xbf16> to vector<8x18x3xbf16>
    %9 = vector.extract_strided_slice %8 {offsets = [0, 0, 0], sizes = [8, 16, 3], strides = [1, 1, 1]} : vector<8x18x3xbf16> to vector<8x16x3xbf16>
    %10 = vector.shape_cast %9 : vector<8x16x3xbf16> to vector<128x3xbf16>
    %c0_15 = arith.constant 0 : index
    %c0_16 = arith.constant 0 : index
    %c0_17 = arith.constant 0 : index
    %11 = vector.load %arg4[%c0_15, %c0_16, %c0_17] : memref<9x3x8xbf16, #tpu.memory_space<vmem>>, vector<1x3x8xbf16>
    %12 = vector.shape_cast %11 : vector<1x3x8xbf16> to vector<3x8xbf16>
    %cst_18 = arith.constant dense<0.000000e+00> : vector<128x8xf32>
    %13 = tpu.matmul %10, %12, %cst_18 {dimension_numbers = #tpu.dot_dimension_numbers<[1], [0], [0], [1], [0, 0, 1, 1], [], []>} : vector<128x3xbf16>, vector<3x8xbf16>, vector<128x8xf32> -> vector<128x8xf32>
    %14 = arith.addf %0, %13 : vector<128x8xf32>
    %15 = vector.extract_strided_slice %8 {offsets = [0, 1, 0], sizes = [8, 16, 3], strides = [1, 1, 1]} : vector<8x18x3xbf16> to vector<8x16x3xbf16>
    %16 = vector.shape_cast %15 : vector<8x16x3xbf16> to vector<128x3xbf16>
    %c1 = arith.constant 1 : index
    %c0_19 = arith.constant 0 : index
    %c0_20 = arith.constant 0 : index
    %17 = vector.load %arg4[%c1, %c0_19, %c0_20] : memref<9x3x8xbf16, #tpu.memory_space<vmem>>, vector<1x3x8xbf16>
    %18 = vector.shape_cast %17 : vector<1x3x8xbf16> to vector<3x8xbf16>
    %cst_21 = arith.constant dense<0.000000e+00> : vector<128x8xf32>
    %19 = tpu.matmul %16, %18, %cst_21 {dimension_numbers = #tpu.dot_dimension_numbers<[1], [0], [0], [1], [0, 0, 1, 1], [], []>} : vector<128x3xbf16>, vector<3x8xbf16>, vector<128x8xf32> -> vector<128x8xf32>
    %20 = arith.addf %14, %19 : vector<128x8xf32>
    %21 = vector.extract_strided_slice %8 {offsets = [0, 2, 0], sizes = [8, 16, 3], strides = [1, 1, 1]} : vector<8x18x3xbf16> to vector<8x16x3xbf16>
    %22 = vector.shape_cast %21 : vector<8x16x3xbf16> to vector<128x3xbf16>
    %c2 = arith.constant 2 : index
    %c0_22 = arith.constant 0 : index
    %c0_23 = arith.constant 0 : index
    %23 = vector.load %arg4[%c2, %c0_22, %c0_23] : memref<9x3x8xbf16, #tpu.memory_space<vmem>>, vector<1x3x8xbf16>
    %24 = vector.shape_cast %23 : vector<1x3x8xbf16> to vector<3x8xbf16>
    %cst_24 = arith.constant dense<0.000000e+00> : vector<128x8xf32>
    %25 = tpu.matmul %22, %24, %cst_24 {dimension_numbers = #tpu.dot_dimension_numbers<[1], [0], [0], [1], [0, 0, 1, 1], [], []>} : vector<128x3xbf16>, vector<3x8xbf16>, vector<128x8xf32> -> vector<128x8xf32>
    %26 = arith.addf %20, %25 : vector<128x8xf32>
    %27 = vector.extract_strided_slice %7 {offsets = [1, 0, 0], sizes = [8, 18, 3], strides = [1, 1, 1]} : vector<10x18x3xbf16> to vector<8x18x3xbf16>
    %28 = vector.extract_strided_slice %27 {offsets = [0, 0, 0], sizes = [8, 16, 3], strides = [1, 1, 1]} : vector<8x18x3xbf16> to vector<8x16x3xbf16>
    %29 = vector.shape_cast %28 : vector<8x16x3xbf16> to vector<128x3xbf16>
    %c3 = arith.constant 3 : index
    %c0_25 = arith.constant 0 : index
    %c0_26 = arith.constant 0 : index
    %30 = vector.load %arg4[%c3, %c0_25, %c0_26] : memref<9x3x8xbf16, #tpu.memory_space<vmem>>, vector<1x3x8xbf16>
    %31 = vector.shape_cast %30 : vector<1x3x8xbf16> to vector<3x8xbf16>
    %cst_27 = arith.constant dense<0.000000e+00> : vector<128x8xf32>
    %32 = tpu.matmul %29, %31, %cst_27 {dimension_numbers = #tpu.dot_dimension_numbers<[1], [0], [0], [1], [0, 0, 1, 1], [], []>} : vector<128x3xbf16>, vector<3x8xbf16>, vector<128x8xf32> -> vector<128x8xf32>
    %33 = arith.addf %26, %32 : vector<128x8xf32>
    %34 = vector.extract_strided_slice %27 {offsets = [0, 1, 0], sizes = [8, 16, 3], strides = [1, 1, 1]} : vector<8x18x3xbf16> to vector<8x16x3xbf16>
    %35 = vector.shape_cast %34 : vector<8x16x3xbf16> to vector<128x3xbf16>
    %c4 = arith.constant 4 : index
    %c0_28 = arith.constant 0 : index
    %c0_29 = arith.constant 0 : index
    %36 = vector.load %arg4[%c4, %c0_28, %c0_29] : memref<9x3x8xbf16, #tpu.memory_space<vmem>>, vector<1x3x8xbf16>
    %37 = vector.shape_cast %36 : vector<1x3x8xbf16> to vector<3x8xbf16>
    %cst_30 = arith.constant dense<0.000000e+00> : vector<128x8xf32>
    %38 = tpu.matmul %35, %37, %cst_30 {dimension_numbers = #tpu.dot_dimension_numbers<[1], [0], [0], [1], [0, 0, 1, 1], [], []>} : vector<128x3xbf16>, vector<3x8xbf16>, vector<128x8xf32> -> vector<128x8xf32>
    %39 = arith.addf %33, %38 : vector<128x8xf32>
    %40 = vector.extract_strided_slice %27 {offsets = [0, 2, 0], sizes = [8, 16, 3], strides = [1, 1, 1]} : vector<8x18x3xbf16> to vector<8x16x3xbf16>
    %41 = vector.shape_cast %40 : vector<8x16x3xbf16> to vector<128x3xbf16>
    %c5 = arith.constant 5 : index
    %c0_31 = arith.constant 0 : index
    %c0_32 = arith.constant 0 : index
    %42 = vector.load %arg4[%c5, %c0_31, %c0_32] : memref<9x3x8xbf16, #tpu.memory_space<vmem>>, vector<1x3x8xbf16>
    %43 = vector.shape_cast %42 : vector<1x3x8xbf16> to vector<3x8xbf16>
    %cst_33 = arith.constant dense<0.000000e+00> : vector<128x8xf32>
    %44 = tpu.matmul %41, %43, %cst_33 {dimension_numbers = #tpu.dot_dimension_numbers<[1], [0], [0], [1], [0, 0, 1, 1], [], []>} : vector<128x3xbf16>, vector<3x8xbf16>, vector<128x8xf32> -> vector<128x8xf32>
    %45 = arith.addf %39, %44 : vector<128x8xf32>
    %46 = vector.extract_strided_slice %7 {offsets = [2, 0, 0], sizes = [8, 18, 3], strides = [1, 1, 1]} : vector<10x18x3xbf16> to vector<8x18x3xbf16>
    %47 = vector.extract_strided_slice %46 {offsets = [0, 0, 0], sizes = [8, 16, 3], strides = [1, 1, 1]} : vector<8x18x3xbf16> to vector<8x16x3xbf16>
    %48 = vector.shape_cast %47 : vector<8x16x3xbf16> to vector<128x3xbf16>
    %c6 = arith.constant 6 : index
    %c0_34 = arith.constant 0 : index
    %c0_35 = arith.constant 0 : index
    %49 = vector.load %arg4[%c6, %c0_34, %c0_35] : memref<9x3x8xbf16, #tpu.memory_space<vmem>>, vector<1x3x8xbf16>
    %50 = vector.shape_cast %49 : vector<1x3x8xbf16> to vector<3x8xbf16>
    %cst_36 = arith.constant dense<0.000000e+00> : vector<128x8xf32>
    %51 = tpu.matmul %48, %50, %cst_36 {dimension_numbers = #tpu.dot_dimension_numbers<[1], [0], [0], [1], [0, 0, 1, 1], [], []>} : vector<128x3xbf16>, vector<3x8xbf16>, vector<128x8xf32> -> vector<128x8xf32>
    %52 = arith.addf %45, %51 : vector<128x8xf32>
    %53 = vector.extract_strided_slice %46 {offsets = [0, 1, 0], sizes = [8, 16, 3], strides = [1, 1, 1]} : vector<8x18x3xbf16> to vector<8x16x3xbf16>
    %54 = vector.shape_cast %53 : vector<8x16x3xbf16> to vector<128x3xbf16>
    %c7 = arith.constant 7 : index
    %c0_37 = arith.constant 0 : index
    %c0_38 = arith.constant 0 : index
    %55 = vector.load %arg4[%c7, %c0_37, %c0_38] : memref<9x3x8xbf16, #tpu.memory_space<vmem>>, vector<1x3x8xbf16>
    %56 = vector.shape_cast %55 : vector<1x3x8xbf16> to vector<3x8xbf16>
    %cst_39 = arith.constant dense<0.000000e+00> : vector<128x8xf32>
    %57 = tpu.matmul %54, %56, %cst_39 {dimension_numbers = #tpu.dot_dimension_numbers<[1], [0], [0], [1], [0, 0, 1, 1], [], []>} : vector<128x3xbf16>, vector<3x8xbf16>, vector<128x8xf32> -> vector<128x8xf32>
    %58 = arith.addf %52, %57 : vector<128x8xf32>
    %59 = vector.extract_strided_slice %46 {offsets = [0, 2, 0], sizes = [8, 16, 3], strides = [1, 1, 1]} : vector<8x18x3xbf16> to vector<8x16x3xbf16>
    %60 = vector.shape_cast %59 : vector<8x16x3xbf16> to vector<128x3xbf16>
    %c8_40 = arith.constant 8 : index
    %c0_41 = arith.constant 0 : index
    %c0_42 = arith.constant 0 : index
    %61 = vector.load %arg4[%c8_40, %c0_41, %c0_42] : memref<9x3x8xbf16, #tpu.memory_space<vmem>>, vector<1x3x8xbf16>
    %62 = vector.shape_cast %61 : vector<1x3x8xbf16> to vector<3x8xbf16>
    %cst_43 = arith.constant dense<0.000000e+00> : vector<128x8xf32>
    %63 = tpu.matmul %60, %62, %cst_43 {dimension_numbers = #tpu.dot_dimension_numbers<[1], [0], [0], [1], [0, 0, 1, 1], [], []>} : vector<128x3xbf16>, vector<3x8xbf16>, vector<128x8xf32> -> vector<128x8xf32>
    %64 = arith.addf %58, %63 : vector<128x8xf32>
    %c0_44 = arith.constant 0 : index
    %c0_45 = arith.constant 0 : index
    %65 = vector.load %arg5[%c0_44, %c0_45] : memref<1x8xf32, #tpu.memory_space<vmem>>, vector<1x8xf32>
    %66 = vector.broadcast %65 : vector<1x8xf32> to vector<128x8xf32>
    %67 = arith.addf %64, %66 : vector<128x8xf32>
    %cst_46 = arith.constant 0.000000e+00 : f32
    %68 = vector.broadcast %cst_46 : f32 to vector<128x8xf32>
    %69 = arith.maximumf %67, %68 : vector<128x8xf32>
    %70 = vector.shape_cast %69 : vector<128x8xf32> to vector<8x16x8xf32>
    %71 = arith.truncf %70 : vector<8x16x8xf32> to vector<8x16x8xbf16>
    %c0_47 = arith.constant 0 : index
    %c0_48 = arith.constant 0 : index
    %c0_49 = arith.constant 0 : index
    %c0_50 = arith.constant 0 : index
    %72 = vector.load %arg6[%c0_47, %c0_48, %c0_49, %c0_50] : memref<1x8x16x8xbf16, #tpu.memory_space<vmem>>, vector<1x8x16x8xbf16>
    %73 = vector.shape_cast %72 : vector<1x8x16x8xbf16> to vector<8x16x8xbf16>
    %74 = vector.shape_cast %71 : vector<8x16x8xbf16> to vector<1x8x16x8xbf16>
    tpu.vector_store %arg6[%c0_47, %c0_48, %c0_49, %c0_50], %74 {strides = array<i32>} : memref<1x8x16x8xbf16, #tpu.memory_space<vmem>>, vector<1x8x16x8xbf16>,
    return
  }
  func.func @transform_0(%arg0: i32, %arg1: i32) -> (i32, i32, i32, i32) {
    %c0_i32 = arith.constant 0 : i32
    %c0_i32_0 = arith.constant 0 : i32
    %c0_i32_1 = arith.constant 0 : i32
    return %arg0, %arg1, %c0_i32, %c0_i32_0 : i32, i32, i32, i32
  }
  func.func @transform_1(%arg0: i32, %arg1: i32) -> (i32, i32, i32, i32) {
    %c1_i32 = arith.constant 1 : i32
    %0 = arith.addi %arg1, %c1_i32 : i32
    %c4_i32 = arith.constant 4 : i32
    %1 = arith.muli %0, %c4_i32 : i32
    %c0_i32 = arith.constant 0 : i32
    %c0_i32_0 = arith.constant 0 : i32
    %c0_i32_1 = arith.constant 0 : i32
    return %arg0, %1, %c0_i32, %c0_i32_0 : i32, i32, i32, i32
  }
  func.func @transform_2(%arg0: i32, %arg1: i32) -> (i32, i32, i32) {
    %c0_i32 = arith.constant 0 : i32
    %c0_i32_0 = arith.constant 0 : i32
    %c0_i32_1 = arith.constant 0 : i32
    %c0_i32_2 = arith.constant 0 : i32
    return %c0_i32, %c0_i32_0, %c0_i32_1 : i32, i32, i32
  }
  func.func @transform_3(%arg0: i32, %arg1: i32) -> (i32, i32) {
    %c0_i32 = arith.constant 0 : i32
    %c0_i32_0 = arith.constant 0 : i32
    %c0_i32_1 = arith.constant 0 : i32
    return %c0_i32, %c0_i32_0 : i32, i32
  }
  func.func @transform_4(%arg0: i32, %arg1: i32) -> (i32, i32, i32, i32) {
    %c0_i32 = arith.constant 0 : i32
    %c0_i32_0 = arith.constant 0 : i32
    %c0_i32_1 = arith.constant 0 : i32
    return %arg0, %arg1, %c0_i32, %c0_i32_0 : i32, i32, i32, i32
  }
}

</mosaic_0001>

<llo_original>
// kernel: tpu_custom_call.1
$region0: #{tpu_custom_call.1}
  #allocation0 [shape = 'u32[]', space=smem, size = 0x4, offset = 0x4, fixed_abs, tag = 'smem constant byte address 0x4 - core index']
  #allocation1 [shape = 'u32[144,128]{1,0:T(1,128)}', space=vmem, size = 0x12000, scoped, tag = 'internal scratch']
  #allocation2 [shape = 'bf16[10,18,3]{2,1,0:T(8,128)(2,1)}', space=vmem, size = 0xf000, scoped, tag = 'scratch operand']
  %s0 = inlined_call_operand.vmem [shape: bf16[2,18,18,3], index: 0, kind: input, shape index: {}]
  %s1 = inlined_call_operand.vmem [shape: bf16[2,18,18,3], index: 1, kind: input, shape index: {}]
  %s2 = inlined_call_operand.vmem [shape: bf16[9,3,8], index: 2, kind: input, shape index: {}]
  %s3 = inlined_call_operand.vmem [shape: f32[1,8], index: 3, kind: input, shape index: {}]
  %s4 = inlined_call_operand.vmem [shape: bf16[2,16,16,8], index: 4, kind: output, shape index: {}]
  %s5 = sld [smem:[#allocation0]]
  $region49: #{tpu_custom_call.1} parent=0
    _
  %s7 = ssub.s32 1, %s5
  %s8 = scalar_select 0, %s7, %s5
  loop: start=0, step=1, limit=6
  $region2: #{tpu_custom_call.1} parent=0 // loop_pre_header
    _
  $region3: #{tpu_custom_call.1} parent=0 // loop_header
    %s10 = sphi 0, %s14
    %p11 = scmp.ge.s32.totalorder %s10, 6
    %s17 = sphi 0, %s29
    %s18 = sphi 0, %s25
    %s19 = sphi 0, %s17
    %s20 = sphi 0, %s18
    %s21 = sphi 0, %s19
    %s22 = sphi 0, %s20
    %s34 = sphi 0, %s36
    %s37 = sphi 0, %s34
    %s38 = sphi 0, %s37
    %s54 = sphi 0, %s38
    %s66 = sphi 0, %s68
    %s69 = sphi 0, %s66
    %s70 = sphi 0, %s69
    %s86 = sphi 0, %s70
    %s90 = sphi 0, %s90
    %s92 = sphi 0, %s90
    %s93 = sphi 0, %s92
    %s107 = sphi 0, %s93
    %s111 = sphi 0, %s111
    %s113 = sphi 0, %s111
    %s114 = sphi 0, %s113
    %s128 = sphi 0, %s114
    %s136 = sphi 0, %s138
    %s139 = sphi 0, %s136
    %s140 = sphi 0, %s139
    %s156 = sphi 0, %s140
  $region4: #{tpu_custom_call.1} parent=0 // loop_header_branch
    %13 = sbr.rel (%p11) target = $region8
  $region5: #{tpu_custom_call.1} parent=0 // loop_body
    %s15 = ssub.s32 %s10, 1
    %s16 = ssub.s32 %s10, 2
    %s23 = sadd.s32 1, %s18
    %p24 = scmp.ge.s32.totalorder %s23, 2
    %s25 = scalar_select %p24, 0, %s23
    %s26 = sadd.s32 1, %s17
    %s27 = scalar_select %p24, %s26, %s17
    %p28 = scmp.ge.s32.totalorder %s27, 2
    %s29 = scalar_select %p28, 0, %s27
    %s30 = ssub.s32 %s17, %s29
    %s31 = ssub.s32 %s18, %s25
    %s32 = sor.u32 %s30, %s31
    %p33 = scmp.eq.s32.totalorder %s32, 0
    %s35 = sadd.s32 %s34, 1
    %s36 = scalar_select %p33, %s34, %s35
    %p39 = pneg %p33
    %p40 = scmp.eq.s32.totalorder %s10, 3
    %p41 = por %p39, %p40
    %p42 = scmp.ne.s32.totalorder %s34, %s37
    %p43 = scmp.eq.s32.totalorder %s10, 0
    %p44 = por %p42, %p43
    %p45 = scmp.ne.s32.totalorder %s34, %s37
    %p46 = scmp.eq.s32.totalorder %s15, 3
    %p47 = por %p45, %p46
    %p48 = scmp.ne.s32.totalorder %s37, %s38
    %p49 = scmp.eq.s32.totalorder %s15, 0
    %p50 = por %p48, %p49
    %p51 = scmp.ne.s32.totalorder %s37, %s38
    %p52 = scmp.eq.s32.totalorder %s16, 3
    %p53 = por %p51, %p52
    %p55 = scmp.ne.s32.totalorder %s38, %s54
    %p56 = scmp.eq.s32.totalorder %s16, 0
    %p57 = por %p55, %p56
    %s58 = sadd.s32 %s18, 1
    %s59 = smul.u32 %s58, 4
    %s60 = sadd.s32 %s25, 1
    %s61 = smul.u32 %s60, 4
    %s62 = ssub.s32 %s17, %s29
    %s63 = ssub.s32 %s59, %s61
    %s64 = sor.u32 %s62, %s63
    %p65 = scmp.eq.s32.totalorder %s64, 0
    %s67 = sadd.s32 %s66, 1
    %s68 = scalar_select %p65, %s66, %s67
    %p71 = pneg %p65
    %p72 = scmp.eq.s32.totalorder %s10, 3
    %p73 = por %p71, %p72
    %p74 = scmp.ne.s32.totalorder %s66, %s69
    %p75 = scmp.eq.s32.totalorder %s10, 0
    %p76 = por %p74, %p75
    %p77 = scmp.ne.s32.totalorder %s66, %s69
    %p78 = scmp.eq.s32.totalorder %s15, 3
    %p79 = por %p77, %p78
    %p80 = scmp.ne.s32.totalorder %s69, %s70
    %p81 = scmp.eq.s32.totalorder %s15, 0
    %p82 = por %p80, %p81
    %p83 = scmp.ne.s32.totalorder %s69, %s70
    %p84 = scmp.eq.s32.totalorder %s16, 3
    %p85 = por %p83, %p84
    %p87 = scmp.ne.s32.totalorder %s70, %s86
    %p88 = scmp.eq.s32.totalorder %s16, 0
    %p89 = por %p87, %p88
    %s91 = sadd.s32 %s90, 1
    %p94 = scmp.eq.s32.totalorder %s10, 3
    %p95 = scmp.ne.s32.totalorder %s90, %s92
    %p96 = scmp.eq.s32.totalorder %s10, 0
    %p97 = por %p95, %p96
    %p98 = scmp.ne.s32.totalorder %s90, %s92
    %p99 = scmp.eq.s32.totalorder %s15, 3
    %p100 = por %p98, %p99
    %p101 = scmp.ne.s32.totalorder %s92, %s93
    %p102 = scmp.eq.s32.totalorder %s15, 0
    %p103 = por %p101, %p102
    %p104 = scmp.ne.s32.totalorder %s92, %s93
    %p105 = scmp.eq.s32.totalorder %s16, 3
    %p106 = por %p104, %p105
    %p108 = scmp.ne.s32.totalorder %s93, %s107
    %p109 = scmp.eq.s32.totalorder %s16, 0
    %p110 = por %p108, %p109
    %s112 = sadd.s32 %s111, 1
    %p115 = scmp.eq.s32.totalorder %s10, 3
    %p116 = scmp.ne.s32.totalorder %s111, %s113
    %p117 = scmp.eq.s32.totalorder %s10, 0
    %p118 = por %p116, %p117
    %p119 = scmp.ne.s32.totalorder %s111, %s113
    %p120 = scmp.eq.s32.totalorder %s15, 3
    %p121 = por %p119, %p120
    %p122 = scmp.ne.s32.totalorder %s113, %s114
    %p123 = scmp.eq.s32.totalorder %s15, 0
    %p124 = por %p122, %p123
    %p125 = scmp.ne.s32.totalorder %s113, %s114
    %p126 = scmp.eq.s32.totalorder %s16, 3
    %p127 = por %p125, %p126
    %p129 = scmp.ne.s32.totalorder %s114, %s128
    %p130 = scmp.eq.s32.totalorder %s16, 0
    %p131 = por %p129, %p130
    %s132 = ssub.s32 %s17, %s29
    %s133 = ssub.s32 %s18, %s25
    %s134 = sor.u32 %s132, %s133
    %p135 = scmp.eq.s32.totalorder %s134, 0
    %s137 = sadd.s32 %s136, 1
    %s138 = scalar_select %p135, %s136, %s137
    %p141 = pneg %p135
    %p142 = scmp.eq.s32.totalorder %s10, 3
    %p143 = por %p141, %p142
    %p144 = scmp.ne.s32.totalorder %s136, %s139
    %p145 = scmp.eq.s32.totalorder %s10, 0
    %p146 = por %p144, %p145
    %p147 = scmp.ne.s32.totalorder %s136, %s139
    %p148 = scmp.eq.s32.totalorder %s15, 3
    %p149 = por %p147, %p148
    %p150 = scmp.ne.s32.totalorder %s139, %s140
    %p151 = scmp.eq.s32.totalorder %s15, 0
    %p152 = por %p150, %p151
    %p153 = scmp.ne.s32.totalorder %s139, %s140
    %p154 = scmp.eq.s32.totalorder %s16, 3
    %p155 = por %p153, %p154
    %p157 = scmp.ne.s32.totalorder %s140, %s156
    %p158 = scmp.eq.s32.totalorder %s16, 0
    %p159 = por %p157, %p158
    %p160 = scmp.le.s32.totalorder 1, %s10
    %p161 = scmp.lt.s32.totalorder %s10, 5
    %p162 = pnand %p160, %p161
    %p163 = pneg %p162
    // Predicated region
    $region9: #{tpu_custom_call.1} parent=5 // pred_check
      _
    $region10: #{tpu_custom_call.1} parent=5 // pred_check_branch
      %165 = sbr.rel (%p162) target = $region12
    $region11: #{tpu_custom_call.1} parent=5 // pred_region
      %s166 = ssub.s32 %s10, 1
      // Predicated region
      $region13: #{tpu_custom_call.1} parent=11 // pred_check
        %p167 = pneg %p103
      $region14: #{tpu_custom_call.1} parent=11 // pred_check_branch
        %169 = sbr.rel (%p167) target = $region16
      $region15: #{tpu_custom_call.1} parent=11 // pred_region
        _
      $region16: #{tpu_custom_call.1} parent=11 // pred_fallthru
        _
      // Predicated region
      $region17: #{tpu_custom_call.1} parent=11 // pred_check
        %p170 = pneg %p124
      $region18: #{tpu_custom_call.1} parent=11 // pred_check_branch
        %172 = sbr.rel (%p170) target = $region20
      $region19: #{tpu_custom_call.1} parent=11 // pred_region
        _
      $region20: #{tpu_custom_call.1} parent=11 // pred_fallthru
        _
    $region12: #{tpu_custom_call.1} parent=5 // pred_fallthru
      _
    %p173 = scmp.lt.s32.totalorder %s10, 4
    // Predicated region
    $region21: #{tpu_custom_call.1} parent=5 // pred_check
      %p174 = pneg %p173
    $region22: #{tpu_custom_call.1} parent=5 // pred_check_branch
      %176 = sbr.rel (%p174) target = $region24
    $region23: #{tpu_custom_call.1} parent=5 // pred_region
      // Predicated region
      $region25: #{tpu_custom_call.1} parent=23 // pred_check
        %p177 = pneg %p44
      $region26: #{tpu_custom_call.1} parent=23 // pred_check_branch
        %179 = sbr.rel (%p177) target = $region28
      $region27: #{tpu_custom_call.1} parent=23 // pred_region
        %s180 = smul.u32 8, %s18
        %s181 = ssub.s32 18, %s180
        %p182 = scmp.lt.s32.totalorder %s181, 8
        %s183 = scalar_select %p182, %s181, 8
        %s184 = smul.u32 64, %s183
        %s185 = smul.u32 %s184, 3
        %p186 = scmp.lt.s32.totalorder %s17, 1
        %s187 = scalar_select %p186, %s17, 1
        %p188 = scmp.lt.s32.totalorder %s180, 17
        %s189 = scalar_select %p188, %s180, 17
        %s190 = smul.addr %s189, 3
        %s191 = smul.addr %s187, 54
        %s192 = sadd.s32 %s190, %s191
        %s193 = smul.addr %s192, 4
        %s194 = scalar_lea.vmem %s0, %s193
        %s195 = smul.u32 8, %s18
        %s196 = ssub.s32 18, %s195
        %p197 = scmp.lt.s32.totalorder %s196, 8
        %s198 = scalar_select %p197, %s196, 8
        %s199 = smul.u32 64, %s198
        %s200 = smul.u32 %s199, 3
      $region28: #{tpu_custom_call.1} parent=23 // pred_fallthru
        _
      // Predicated region
      $region29: #{tpu_custom_call.1} parent=23 // pred_check
        %p201 = pneg %p76
      $region30: #{tpu_custom_call.1} parent=23 // pred_check_branch
        %203 = sbr.rel (%p201) target = $region32
      $region31: #{tpu_custom_call.1} parent=23 // pred_region
        %s204 = sadd.s32 %s18, 1
        %s205 = smul.u32 %s204, 4
        %s206 = smul.u32 2, %s205
        %p207 = scmp.lt.s32.totalorder %s17, 1
        %s208 = scalar_select %p207, %s17, 1
        %p209 = scmp.lt.s32.totalorder %s206, 17
        %s210 = scalar_select %p209, %s206, 17
        %s211 = smul.addr %s210, 3
        %s212 = smul.addr %s208, 54
        %s213 = sadd.s32 %s211, %s212
        %s214 = smul.addr %s213, 4
        %s215 = scalar_lea.vmem %s1, %s214
        %s216 = sadd.s32 %s18, 1
        %s217 = smul.u32 %s216, 4
        %s218 = smul.u32 2, %s217
      $region32: #{tpu_custom_call.1} parent=23 // pred_fallthru
        _
    $region24: #{tpu_custom_call.1} parent=5 // pred_fallthru
      _
    %p219 = scmp.le.s32.totalorder 1, %s10
    %p220 = scmp.lt.s32.totalorder %s10, 5
    %p221 = pnand %p219, %p220
    %p222 = pneg %p221
    // Predicated region
    $region33: #{tpu_custom_call.1} parent=5 // pred_check
      _
    $region34: #{tpu_custom_call.1} parent=5 // pred_check_branch
      %224 = sbr.rel (%p221) target = $region36
    $region35: #{tpu_custom_call.1} parent=5 // pred_region
      %s225 = ssub.s32 %s10, 1
      %s226 = smul.u32 8, %s20
      %s227 = ssub.s32 18, %s226
      %p228 = scmp.lt.s32.totalorder %s227, 8
      %s229 = scalar_select %p228, %s227, 8
      %s230 = smul.u32 64, %s229
      %s231 = smul.u32 %s230, 3
      %p232 = scmp.lt.s32.totalorder %s19, 1
      %s233 = scalar_select %p232, %s19, 1
      %p234 = scmp.lt.s32.totalorder %s226, 17
      %s235 = scalar_select %p234, %s226, 17
      %s236 = smul.addr %s235, 3
      %s237 = smul.addr %s233, 54
      %s238 = sadd.s32 %s236, %s237
      %s239 = smul.addr %s238, 4
      %s240 = scalar_lea.vmem %s0, %s239
      %p241 = pneg %p50
      %p242 = pneg %p47
      %s243 = sadd.s32 %s20, 1
      %s244 = smul.u32 %s243, 4
      %s245 = smul.u32 2, %s244
      %p246 = scmp.lt.s32.totalorder %s19, 1
      %s247 = scalar_select %p246, %s19, 1
      %p248 = scmp.lt.s32.totalorder %s245, 17
      %s249 = scalar_select %p248, %s245, 17
      %s250 = smul.addr %s249, 3
      %s251 = smul.addr %s247, 54
      %s252 = sadd.s32 %s250, %s251
      %s253 = smul.addr %s252, 4
      %s254 = scalar_lea.vmem %s1, %s253
      %p255 = pneg %p82
      %p256 = pneg %p79
      %p257 = pneg %p103
      %p258 = pneg %p100
      %p259 = pneg %p124
      %p260 = pneg %p121
      %p261 = pneg %p152
      %p262 = pneg %p149
      %s263 = smul.u32 8, %s20
      %p264 = scmp.lt.s32.totalorder %s19, 1
      %s265 = scalar_select %p264, %s19, 1
      %p266 = scmp.lt.s32.totalorder %s263, 15
      %s267 = scalar_select %p266, %s263, 15
      %s268 = smul.addr %s267, 2
      %s269 = smul.addr %s265, 32
      %s270 = sadd.s32 %s268, %s269
      %s271 = smul.addr %s270, 4
      %s272 = scalar_lea.vmem %s4, %s271
      %s273 = smul.u32 8, %s20
      %s274 = ssub.s32 18, %s273
      %p275 = scmp.lt.s32.totalorder %s274, 8
      %s276 = scalar_select %p275, %s274, 8
      %s277 = smul.u32 64, %s276
      %s278 = smul.u32 %s277, 3
      %p279 = scmp.lt.s32.totalorder %s19, 1
      %s280 = scalar_select %p279, %s19, 1
      %p281 = scmp.lt.s32.totalorder %s273, 17
      %s282 = scalar_select %p281, %s273, 17
      %s283 = smul.addr %s282, 3
      %s284 = smul.addr %s280, 54
      %s285 = sadd.s32 %s283, %s284
      %s286 = smul.addr %s285, 4
      %s287 = scalar_lea.vmem %s0, %s286
      %s288 = smul.u32 8, %s20
      %s289 = ssub.s32 18, %s288
      %p290 = scmp.lt.s32.totalorder %s289, 8
      %s291 = scalar_select %p290, %s289, 8
      %s292 = smul.u32 64, %s291
      %s293 = smul.u32 %s292, 3
      %s294 = sadd.s32 %s20, 1
      %s295 = smul.u32 %s294, 4
      %s296 = smul.u32 2, %s295
      %p297 = scmp.lt.s32.totalorder %s19, 1
      %s298 = scalar_select %p297, %s19, 1
      %p299 = scmp.lt.s32.totalorder %s296, 17
      %s300 = scalar_select %p299, %s296, 17
      %s301 = smul.addr %s300, 3
      %s302 = smul.addr %s298, 54
      %s303 = sadd.s32 %s301, %s302
      %s304 = smul.addr %s303, 4
      %s305 = scalar_lea.vmem %s1, %s304
      %s306 = sadd.s32 %s20, 1
      %s307 = smul.u32 %s306, 4
      %s308 = smul.u32 2, %s307
      %s309 = smul.u32 8, %s20
      %p310 = scmp.lt.s32.totalorder %s19, 1
      %s311 = scalar_select %p310, %s19, 1
      %p312 = scmp.lt.s32.totalorder %s309, 15
      %s313 = scalar_select %p312, %s309, 15
      %s314 = smul.addr %s313, 2
      %s315 = smul.addr %s311, 32
      %s316 = sadd.s32 %s314, %s315
      %s317 = smul.addr %s316, 4
      %s318 = scalar_lea.vmem %s4, %s317
      %s319 = smul.u32 8, %s20
      %v321 = vld [vmem:[%s287] sm:$0xf]
      %v322 = vld [vmem:[%s287 + $0x4] sm:$0xf]
      %v323 = vld [vmem:[%s287 + $0x8] sm:$0x1]
      %v324 = vld [vmem:[%s287 + $0xc] sm:$0xf]
      %v325 = vld [vmem:[%s287 + $0x10] sm:$0xf]
      %v326 = vld [vmem:[%s287 + $0x14] sm:$0x1]
      %v327 = vld [vmem:[%s287 + $0x18] sm:$0xf]
      %v328 = vld [vmem:[%s287 + $0x1c] sm:$0xf]
      %v329 = vld [vmem:[%s287 + $0x20] sm:$0x1]
      %v330 = vld [vmem:[%s287 + $0x24] sm:$0xf]
      %v331 = vld [vmem:[%s287 + $0x28] sm:$0xf]
      %v332 = vld [vmem:[%s287 + $0x2c] sm:$0x1]
      %v333 = vld [vmem:[%s287 + $0x30] sm:$0xf]
      %v334 = vld [vmem:[%s287 + $0x34] sm:$0xf]
      %v335 = vld [vmem:[%s287 + $0x38] sm:$0x1]
      %v336 = vld [vmem:[%s287 + $0x3c] sm:$0xf]
      %v337 = vld [vmem:[%s287 + $0x40] sm:$0xf]
      %v338 = vld [vmem:[%s287 + $0x44] sm:$0x1]
      %v339 = vld [vmem:[%s287 + $0x48] sm:$0xf]
      %v340 = vld [vmem:[%s287 + $0x4c] sm:$0xf]
      %v341 = vld [vmem:[%s287 + $0x50] sm:$0x1]
      %v342 = vld [vmem:[%s287 + $0x54] sm:$0xf]
      %v343 = vld [vmem:[%s287 + $0x58] sm:$0xf]
      %v344 = vld [vmem:[%s287 + $0x5c] sm:$0x1]
      %vm345 = vcmask 19456
      %346 = vst.msk [vmem:[#allocation2] sm:$0xf] %vm345, %v321
      %347 = vst.msk [vmem:[#allocation2 + $0x4] sm:$0xf] %vm345, %v322
      %vm348 = vcmask 16384
      %349 = vst.msk [vmem:[#allocation2 + $0x8] sm:$0x1] %vm348, %v323
      %350 = vst.msk [vmem:[#allocation2 + $0xc] sm:$0xf] %vm345, %v324
      %351 = vst.msk [vmem:[#allocation2 + $0x10] sm:$0xf] %vm345, %v325
      %352 = vst.msk [vmem:[#allocation2 + $0x14] sm:$0x1] %vm348, %v326
      %353 = vst.msk [vmem:[#allocation2 + $0x18] sm:$0xf] %vm345, %v327
      %354 = vst.msk [vmem:[#allocation2 + $0x1c] sm:$0xf] %vm345, %v328
      %355 = vst.msk [vmem:[#allocation2 + $0x20] sm:$0x1] %vm348, %v329
      %356 = vst.msk [vmem:[#allocation2 + $0x24] sm:$0xf] %vm345, %v330
      %357 = vst.msk [vmem:[#allocation2 + $0x28] sm:$0xf] %vm345, %v331
      %358 = vst.msk [vmem:[#allocation2 + $0x2c] sm:$0x1] %vm348, %v332
      %359 = vst.msk [vmem:[#allocation2 + $0x30] sm:$0xf] %vm345, %v333
      %360 = vst.msk [vmem:[#allocation2 + $0x34] sm:$0xf] %vm345, %v334
      %361 = vst.msk [vmem:[#allocation2 + $0x38] sm:$0x1] %vm348, %v335
      %362 = vst.msk [vmem:[#allocation2 + $0x3c] sm:$0xf] %vm345, %v336
      %363 = vst.msk [vmem:[#allocation2 + $0x40] sm:$0xf] %vm345, %v337
      %364 = vst.msk [vmem:[#allocation2 + $0x44] sm:$0x1] %vm348, %v338
      %365 = vst.msk [vmem:[#allocation2 + $0x48] sm:$0xf] %vm345, %v339
      %366 = vst.msk [vmem:[#allocation2 + $0x4c] sm:$0xf] %vm345, %v340
      %367 = vst.msk [vmem:[#allocation2 + $0x50] sm:$0x1] %vm348, %v341
      %368 = vst.msk [vmem:[#allocation2 + $0x54] sm:$0xf] %vm345, %v342
      %369 = vst.msk [vmem:[#allocation2 + $0x58] sm:$0xf] %vm345, %v343
      %370 = vst.msk [vmem:[#allocation2 + $0x5c] sm:$0x1] %vm348, %v344
      %v371 = vld [vmem:[%s305] sm:$0xf]
      %v372 = vld [vmem:[%s305 + $0x4] sm:$0xf]
      %v373 = vld [vmem:[%s305 + $0x8] sm:$0x1]
      %v374 = vld [vmem:[%s305 + $0xc] sm:$0xf]
      %v375 = vld [vmem:[%s305 + $0x10] sm:$0xf]
      %v376 = vld [vmem:[%s305 + $0x14] sm:$0x1]
      %s377 = scalar_lea.vmem [#allocation2], 96
      %378 = vst.msk [vmem:[%s377] sm:$0xf] %vm345, %v371
      %379 = vst.msk [vmem:[%s377 + $0x4] sm:$0xf] %vm345, %v372
      %380 = vst.msk [vmem:[%s377 + $0x8] sm:$0x1] %vm348, %v373
      %381 = vst.msk [vmem:[%s377 + $0xc] sm:$0xf] %vm345, %v374
      %382 = vst.msk [vmem:[%s377 + $0x10] sm:$0xf] %vm345, %v375
      %383 = vst.msk [vmem:[%s377 + $0x14] sm:$0x1] %vm348, %v376
      %v384 = vld [vmem:[#allocation2] sm:$0xf]
      %v385 = vld [vmem:[#allocation2 + $0x4] sm:$0xf]
      %v386 = vld [vmem:[#allocation2 + $0x8] sm:$0x1]
      %v387 = vld [vmem:[#allocation2 + $0xc] sm:$0xf]
      %v388 = vld [vmem:[#allocation2 + $0x10] sm:$0xf]
      %v389 = vld [vmem:[#allocation2 + $0x14] sm:$0x1]
      %v390 = vld [vmem:[#allocation2 + $0x18] sm:$0xf]
      %v391 = vld [vmem:[#allocation2 + $0x1c] sm:$0xf]
      %v392 = vld [vmem:[#allocation2 + $0x20] sm:$0x1]
      %v393 = vld [vmem:[#allocation2 + $0x24] sm:$0xf]
      %v394 = vld [vmem:[#allocation2 + $0x28] sm:$0xf]
      %v395 = vld [vmem:[#allocation2 + $0x2c] sm:$0x1]
      %v396 = vld [vmem:[#allocation2 + $0x30] sm:$0xf]
      %v397 = vld [vmem:[#allocation2 + $0x34] sm:$0xf]
      %v398 = vld [vmem:[#allocation2 + $0x38] sm:$0x1]
      %v399 = vld [vmem:[#allocation2 + $0x3c] sm:$0xf]
      %v400 = vld [vmem:[#allocation2 + $0x40] sm:$0xf]
      %v401 = vld [vmem:[#allocation2 + $0x44] sm:$0x1]
      %v402 = vld [vmem:[#allocation2 + $0x48] sm:$0xf]
      %v403 = vld [vmem:[#allocation2 + $0x4c] sm:$0xf]
      %v404 = vld [vmem:[#allocation2 + $0x50] sm:$0x1]
      %v405 = vld [vmem:[#allocation2 + $0x54] sm:$0xf]
      %v406 = vld [vmem:[#allocation2 + $0x58] sm:$0xf]
      %v407 = vld [vmem:[#allocation2 + $0x5c] sm:$0x1]
      %v408 = vld [vmem:[#allocation2 + $0x60] sm:$0xf]
      %v409 = vld [vmem:[#allocation2 + $0x64] sm:$0xf]
      %v410 = vld [vmem:[#allocation2 + $0x68] sm:$0x1]
      %v411 = vld [vmem:[#allocation2 + $0x6c] sm:$0xf]
      %v412 = vld [vmem:[#allocation2 + $0x70] sm:$0xf]
      %v413 = vld [vmem:[#allocation2 + $0x74] sm:$0x1]
      %v414 = vld [vmem:[%s2] sm:$0x3]
      %vm415 = vsmask.f32 3328
      %vm416 = vsmask.f32 7440
      %vm417 = vmor %vm415, %vm416
      %v419 = vshrl.u32 %v384, 16
      %v421 = vrot.slane %v419, 4
      %v422 = vshll.u32 %v384, 16
      %v424 = vrot.slane %v422, 5
      %v425 = vor.u32 %v421, %v424
      %v426 = vrot.slane %v425, 4
      %v428 = vshll.u32 %v385, 16
      %v430 = vrot.slane %v428, 5
      %v431 = vsel %vm417, %v426, %v430
      %v432 = vshrl.u32 %v385, 16
      %v434 = vrot.slane %v432, 4
      %v435 = vor.u32 %v434, %v430
      %v436 = vrot.slane %v435, 4
      %v438 = vshll.u32 %v386, 16
      %v440 = vrot.slane %v438, 5
      %v441 = vsel %vm417, %v436, %v440
      %v443 = vshrl.u32 %v387, 16
      %v445 = vrot.slane %v443, 4
      %v446 = vshll.u32 %v387, 16
      %v448 = vrot.slane %v446, 5
      %v449 = vor.u32 %v445, %v448
      %v450 = vrot.slane %v449, 4
      %v452 = vshll.u32 %v388, 16
      %v454 = vrot.slane %v452, 5
      %v455 = vsel %vm417, %v450, %v454
      %v456 = vshrl.u32 %v388, 16
      %v458 = vrot.slane %v456, 4
      %v459 = vor.u32 %v458, %v454
      %v460 = vrot.slane %v459, 4
      %v462 = vshll.u32 %v389, 16
      %v464 = vrot.slane %v462, 5
      %v465 = vsel %vm417, %v460, %v464
      %v467 = vshrl.u32 %v390, 16
      %v469 = vrot.slane %v467, 4
      %v470 = vshll.u32 %v390, 16
      %v472 = vrot.slane %v470, 5
      %v473 = vor.u32 %v469, %v472
      %v474 = vrot.slane %v473, 4
      %v476 = vshll.u32 %v391, 16
      %v478 = vrot.slane %v476, 5
      %v479 = vsel %vm417, %v474, %v478
      %v480 = vshrl.u32 %v391, 16
      %v482 = vrot.slane %v480, 4
      %v483 = vor.u32 %v482, %v478
      %v484 = vrot.slane %v483, 4
      %v486 = vshll.u32 %v392, 16
      %v488 = vrot.slane %v486, 5
      %v489 = vsel %vm417, %v484, %v488
      %v491 = vshrl.u32 %v393, 16
      %v493 = vrot.slane %v491, 4
      %v494 = vshll.u32 %v393, 16
      %v496 = vrot.slane %v494, 5
      %v497 = vor.u32 %v493, %v496
      %v498 = vrot.slane %v497, 4
      %v500 = vshll.u32 %v394, 16
      %v502 = vrot.slane %v500, 5
      %v503 = vsel %vm417, %v498, %v502
      %v504 = vshrl.u32 %v394, 16
      %v506 = vrot.slane %v504, 4
      %v507 = vor.u32 %v506, %v502
      %v508 = vrot.slane %v507, 4
      %v510 = vshll.u32 %v395, 16
      %v512 = vrot.slane %v510, 5
      %v513 = vsel %vm417, %v508, %v512
      %v515 = vshrl.u32 %v396, 16
      %v517 = vrot.slane %v515, 4
      %v518 = vshll.u32 %v396, 16
      %v520 = vrot.slane %v518, 5
      %v521 = vor.u32 %v517, %v520
      %v522 = vrot.slane %v521, 4
      %v524 = vshll.u32 %v397, 16
      %v526 = vrot.slane %v524, 5
      %v527 = vsel %vm417, %v522, %v526
      %v528 = vshrl.u32 %v397, 16
      %v530 = vrot.slane %v528, 4
      %v531 = vor.u32 %v530, %v526
      %v532 = vrot.slane %v531, 4
      %v534 = vshll.u32 %v398, 16
      %v536 = vrot.slane %v534, 5
      %v537 = vsel %vm417, %v532, %v536
      %v539 = vshrl.u32 %v399, 16
      %v541 = vrot.slane %v539, 4
      %v542 = vshll.u32 %v399, 16
      %v544 = vrot.slane %v542, 5
      %v545 = vor.u32 %v541, %v544
      %v546 = vrot.slane %v545, 4
      %v548 = vshll.u32 %v400, 16
      %v550 = vrot.slane %v548, 5
      %v551 = vsel %vm417, %v546, %v550
      %v552 = vshrl.u32 %v400, 16
      %v554 = vrot.slane %v552, 4
      %v555 = vor.u32 %v554, %v550
      %v556 = vrot.slane %v555, 4
      %v558 = vshll.u32 %v401, 16
      %v560 = vrot.slane %v558, 5
      %v561 = vsel %vm417, %v556, %v560
      %v563 = vshrl.u32 %v402, 16
      %v565 = vrot.slane %v563, 4
      %v566 = vshll.u32 %v402, 16
      %v568 = vrot.slane %v566, 5
      %v569 = vor.u32 %v565, %v568
      %v570 = vrot.slane %v569, 4
      %v572 = vshll.u32 %v403, 16
      %v574 = vrot.slane %v572, 5
      %v575 = vsel %vm417, %v570, %v574
      %v576 = vshrl.u32 %v403, 16
      %v578 = vrot.slane %v576, 4
      %v579 = vor.u32 %v578, %v574
      %v580 = vrot.slane %v579, 4
      %v582 = vshll.u32 %v404, 16
      %v584 = vrot.slane %v582, 5
      %v585 = vsel %vm417, %v580, %v584
      %v587 = vshrl.u32 %v405, 16
      %v589 = vrot.slane %v587, 4
      %v590 = vshll.u32 %v405, 16
      %v592 = vrot.slane %v590, 5
      %v593 = vor.u32 %v589, %v592
      %v594 = vrot.slane %v593, 4
      %v596 = vshll.u32 %v406, 16
      %v598 = vrot.slane %v596, 5
      %v599 = vsel %vm417, %v594, %v598
      %v600 = vshrl.u32 %v406, 16
      %v602 = vrot.slane %v600, 4
      %v603 = vor.u32 %v602, %v598
      %v604 = vrot.slane %v603, 4
      %v606 = vshll.u32 %v407, 16
      %v608 = vrot.slane %v606, 5
      %v609 = vsel %vm417, %v604, %v608
      %s610 = scalar_lea.vmem %s2, 2
      %v611 = vld [vmem:[%s610] sm:$0x3]
      %v612 = vunpack.c.l.b16 %v431
      %v613 = vunpack.c.l.b16 %v441
      %v614 = vunpack.c.l.b16 %v455
      %v615 = vunpack.c.l.b16 %v465
      %v616 = vunpack.c.l.b16 %v479
      %v617 = vunpack.c.l.b16 %v489
      %v618 = vunpack.c.l.b16 %v503
      %v619 = vunpack.c.l.b16 %v513
      %v620 = vunpack.c.l.b16 %v527
      %v621 = vunpack.c.l.b16 %v537
      %v622 = vunpack.c.l.b16 %v551
      %v623 = vunpack.c.l.b16 %v561
      %v624 = vunpack.c.l.b16 %v575
      %v625 = vunpack.c.l.b16 %v585
      %v626 = vunpack.c.l.b16 %v599
      %v627 = vunpack.c.l.b16 %v609
      %v628 = vpack.c.b16 %v613, %v612
      %v629 = vpack.c.b16 %v615, %v614
      %v630 = vpack.c.b16 %v617, %v616
      %v631 = vpack.c.b16 %v619, %v618
      %v632 = vpack.c.b16 %v621, %v620
      %v633 = vpack.c.b16 %v623, %v622
      %v634 = vpack.c.b16 %v625, %v624
      %v635 = vpack.c.b16 %v627, %v626
      %vm636 = vcmask 23552
      %v638 = vsel %vm636, %v628, 0
      %v641 = vsel %vm636, %v629, 0
      %v644 = vsel %vm636, %v630, 0
      %v647 = vsel %vm636, %v631, 0
      %v650 = vsel %vm636, %v632, 0
      %v653 = vsel %vm636, %v633, 0
      %v656 = vsel %vm636, %v634, 0
      %v659 = vsel %vm636, %v635, 0
      %vm661 = vcmask 1040384
      %vm662 = vcmask 1041408
      %v663 = vsel %vm661, 4294967295, 65535
      %v664 = vsel %vm662, %v663, 0
      %v666 = vand.u32 %v611, %v664
      %668 = vmatprep.subr.bf16.mxu0 0
      %669 = vmatpush1.bf16.msra.mxu0 %v666
      %670 = vmatprep.subr.bf16.mxu0 0
      %671 = vmatpush1.bf16.msra.mxu0 0
      %672 = vmatprep.subr.bf16.mxu0 0
      %673 = vmatpush1.bf16.msra.mxu0 0
      %674 = vmatprep.subr.bf16.mxu0 0
      %675 = vmatpush1.bf16.msra.mxu0 0
      %676 = vmatprep.subr.bf16.mxu0 0
      %677 = vmatpush1.bf16.msra.mxu0 0
      %678 = vmatprep.subr.bf16.mxu0 0
      %679 = vmatpush1.bf16.msra.mxu0 0
      %680 = vmatprep.subr.bf16.mxu0 0
      %681 = vmatpush1.bf16.msra.mxu0 0
      %682 = vmatprep.subr.bf16.mxu0 0
      %683 = vmatpush1.bf16.msra.mxu0 0
      %684 = vmatprep.subr.bf16.mxu0 0
      %685 = vmatpush1.bf16.msra.mxu0 0
      %686 = vmatprep.subr.bf16.mxu0 0
      %687 = vmatpush1.bf16.msra.mxu0 0
      %688 = vmatprep.subr.bf16.mxu0 0
      %689 = vmatpush1.bf16.msra.mxu0 0
      %690 = vmatprep.subr.bf16.mxu0 0
      %691 = vmatpush1.bf16.msra.mxu0 0
      %692 = vmatprep.subr.bf16.mxu0 0
      %693 = vmatpush1.bf16.msra.mxu0 0
      %694 = vmatprep.subr.bf16.mxu0 0
      %695 = vmatpush1.bf16.msra.mxu0 0
      %696 = vmatprep.subr.bf16.mxu0 0
      %697 = vmatpush1.bf16.msra.mxu0 0
      %698 = vmatprep.subr.bf16.mxu0 0
      %699 = vmatpush1.bf16.msra.mxu0 0
      %700 = vmatprep.mubr.bf16.mxu0 0
      %701 = vmatmul.mubr.bf16.gmra.mrb[0].mxu0 %v638
      %v702 = vpop.f32.mrb[0].mxu0
      %v703 = vadd.f32 0.0, %v702
      %v704 = vpop.f32.mrb[0].mxu0
      %v705 = vpop.f32.mrb[0].mxu0
      %v706 = vadd.f32 0.0, %v705
      %v707 = vpop.f32.mrb[0].mxu0
      %708 = vmatprep.mubr.bf16.mxu0 0
      %709 = vmatmul.mubr.bf16.gmra.mrb[0].mxu0 %v641
      %v710 = vpop.f32.mrb[0].mxu0
      %v711 = vadd.f32 0.0, %v710
      %v712 = vpop.f32.mrb[0].mxu0
      %v713 = vpop.f32.mrb[0].mxu0
      %v714 = vadd.f32 0.0, %v713
      %v715 = vpop.f32.mrb[0].mxu0
      %716 = vmatprep.mubr.bf16.mxu0 0
      %717 = vmatmul.mubr.bf16.gmra.mrb[0].mxu0 %v644
      %v718 = vpop.f32.mrb[0].mxu0
      %v719 = vadd.f32 0.0, %v718
      %v720 = vpop.f32.mrb[0].mxu0
      %v721 = vpop.f32.mrb[0].mxu0
      %v722 = vadd.f32 0.0, %v721
      %v723 = vpop.f32.mrb[0].mxu0
      %724 = vmatprep.mubr.bf16.mxu0 0
      %725 = vmatmul.mubr.bf16.gmra.mrb[0].mxu0 %v647
      %v726 = vpop.f32.mrb[0].mxu0
      %v727 = vadd.f32 0.0, %v726
      %v728 = vpop.f32.mrb[0].mxu0
      %v729 = vpop.f32.mrb[0].mxu0
      %v730 = vadd.f32 0.0, %v729
      %v731 = vpop.f32.mrb[0].mxu0
      %732 = vmatprep.mubr.bf16.mxu0 0
      %733 = vmatmul.mubr.bf16.gmra.mrb[0].mxu0 %v650
      %v734 = vpop.f32.mrb[0].mxu0
      %v735 = vadd.f32 0.0, %v734
      %v736 = vpop.f32.mrb[0].mxu0
      %v737 = vpop.f32.mrb[0].mxu0
      %v738 = vadd.f32 0.0, %v737
      %v739 = vpop.f32.mrb[0].mxu0
      %740 = vmatprep.mubr.bf16.mxu0 0
      %741 = vmatmul.mubr.bf16.gmra.mrb[0].mxu0 %v653
      %v742 = vpop.f32.mrb[0].mxu0
      %v743 = vadd.f32 0.0, %v742
      %v744 = vpop.f32.mrb[0].mxu0
      %v745 = vpop.f32.mrb[0].mxu0
      %v746 = vadd.f32 0.0, %v745
      %v747 = vpop.f32.mrb[0].mxu0
      %748 = vmatprep.mubr.bf16.mxu0 0
      %749 = vmatmul.mubr.bf16.gmra.mrb[0].mxu0 %v656
      %v750 = vpop.f32.mrb[0].mxu0
      %v751 = vadd.f32 0.0, %v750
      %v752 = vpop.f32.mrb[0].mxu0
      %v753 = vpop.f32.mrb[0].mxu0
      %v754 = vadd.f32 0.0, %v753
      %v755 = vpop.f32.mrb[0].mxu0
      %756 = vmatprep.mubr.bf16.mxu0 0
      %757 = vmatmul.mubr.bf16.gmra.mrb[0].mxu0 %v659
      %v758 = vpop.f32.mrb[0].mxu0
      %v759 = vadd.f32 0.0, %v758
      %v760 = vpop.f32.mrb[0].mxu0
      %v761 = vpop.f32.mrb[0].mxu0
      %v762 = vadd.f32 0.0, %v761
      %v763 = vpop.f32.mrb[0].mxu0
      %764 = vdwg.mxu0
      %v781 = vunpack.c.l.b16 %v384
      %v782 = vunpack.c.l.b16 %v385
      %v783 = vunpack.c.l.b16 %v387
      %v784 = vunpack.c.l.b16 %v388
      %v785 = vunpack.c.l.b16 %v390
      %v786 = vunpack.c.l.b16 %v391
      %v787 = vunpack.c.l.b16 %v393
      %v788 = vunpack.c.l.b16 %v394
      %v789 = vunpack.c.l.b16 %v396
      %v790 = vunpack.c.l.b16 %v397
      %v791 = vunpack.c.l.b16 %v399
      %v792 = vunpack.c.l.b16 %v400
      %v793 = vunpack.c.l.b16 %v402
      %v794 = vunpack.c.l.b16 %v403
      %v795 = vunpack.c.l.b16 %v405
      %v796 = vunpack.c.l.b16 %v406
      %v797 = vpack.c.b16 %v782, %v781
      %v798 = vpack.c.b16 %v784, %v783
      %v799 = vpack.c.b16 %v786, %v785
      %v800 = vpack.c.b16 %v788, %v787
      %v801 = vpack.c.b16 %v790, %v789
      %v802 = vpack.c.b16 %v792, %v791
      %v803 = vpack.c.b16 %v794, %v793
      %v804 = vpack.c.b16 %v796, %v795
      %v806 = vsel %vm636, %v797, 0
      %v809 = vsel %vm636, %v798, 0
      %v812 = vsel %vm636, %v799, 0
      %v815 = vsel %vm636, %v800, 0
      %v818 = vsel %vm636, %v801, 0
      %v821 = vsel %vm636, %v802, 0
      %v824 = vsel %vm636, %v803, 0
      %v827 = vsel %vm636, %v804, 0
      %v830 = vand.u32 %v414, %v664
      %832 = vmatprep.subr.bf16.mxu0 0
      %833 = vmatpush1.bf16.msra.mxu0 %v830
      %834 = vmatprep.subr.bf16.mxu0 0
      %835 = vmatpush1.bf16.msra.mxu0 0
      %836 = vmatprep.subr.bf16.mxu0 0
      %837 = vmatpush1.bf16.msra.mxu0 0
      %838 = vmatprep.subr.bf16.mxu0 0
      %839 = vmatpush1.bf16.msra.mxu0 0
      %840 = vmatprep.subr.bf16.mxu0 0
      %841 = vmatpush1.bf16.msra.mxu0 0
      %842 = vmatprep.subr.bf16.mxu0 0
      %843 = vmatpush1.bf16.msra.mxu0 0
      %844 = vmatprep.subr.bf16.mxu0 0
      %845 = vmatpush1.bf16.msra.mxu0 0
      %846 = vmatprep.subr.bf16.mxu0 0
      %847 = vmatpush1.bf16.msra.mxu0 0
      %848 = vmatprep.subr.bf16.mxu0 0
      %849 = vmatpush1.bf16.msra.mxu0 0
      %850 = vmatprep.subr.bf16.mxu0 0
      %851 = vmatpush1.bf16.msra.mxu0 0
      %852 = vmatprep.subr.bf16.mxu0 0
      %853 = vmatpush1.bf16.msra.mxu0 0
      %854 = vmatprep.subr.bf16.mxu0 0
      %855 = vmatpush1.bf16.msra.mxu0 0
      %856 = vmatprep.subr.bf16.mxu0 0
      %857 = vmatpush1.bf16.msra.mxu0 0
      %858 = vmatprep.subr.bf16.mxu0 0
      %859 = vmatpush1.bf16.msra.mxu0 0
      %860 = vmatprep.subr.bf16.mxu0 0
      %861 = vmatpush1.bf16.msra.mxu0 0
      %862 = vmatprep.subr.bf16.mxu0 0
      %863 = vmatpush1.bf16.msra.mxu0 0
      %864 = vmatprep.mubr.bf16.mxu0 0
      %865 = vmatmul.mubr.bf16.gmra.mrb[0].mxu0 %v806
      %v866 = vpop.f32.mrb[0].mxu0
      %v867 = vadd.f32 %v703, %v866
      %v868 = vpop.f32.mrb[0].mxu0
      %v869 = vpop.f32.mrb[0].mxu0
      %v870 = vadd.f32 %v706, %v869
      %v871 = vpop.f32.mrb[0].mxu0
      %872 = vmatprep.mubr.bf16.mxu0 0
      %873 = vmatmul.mubr.bf16.gmra.mrb[0].mxu0 %v809
      %v874 = vpop.f32.mrb[0].mxu0
      %v875 = vadd.f32 %v711, %v874
      %v876 = vpop.f32.mrb[0].mxu0
      %v877 = vpop.f32.mrb[0].mxu0
      %v878 = vadd.f32 %v714, %v877
      %v879 = vpop.f32.mrb[0].mxu0
      %880 = vmatprep.mubr.bf16.mxu0 0
      %881 = vmatmul.mubr.bf16.gmra.mrb[0].mxu0 %v812
      %v882 = vpop.f32.mrb[0].mxu0
      %v883 = vadd.f32 %v719, %v882
      %v884 = vpop.f32.mrb[0].mxu0
      %v885 = vpop.f32.mrb[0].mxu0
      %v886 = vadd.f32 %v722, %v885
      %v887 = vpop.f32.mrb[0].mxu0
      %888 = vmatprep.mubr.bf16.mxu0 0
      %889 = vmatmul.mubr.bf16.gmra.mrb[0].mxu0 %v815
      %v890 = vpop.f32.mrb[0].mxu0
      %v891 = vadd.f32 %v727, %v890
      %v892 = vpop.f32.mrb[0].mxu0
      %v893 = vpop.f32.mrb[0].mxu0
      %v894 = vadd.f32 %v730, %v893
      %v895 = vpop.f32.mrb[0].mxu0
      %896 = vmatprep.mubr.bf16.mxu0 0
      %897 = vmatmul.mubr.bf16.gmra.mrb[0].mxu0 %v818
      %v898 = vpop.f32.mrb[0].mxu0
      %v899 = vadd.f32 %v735, %v898
      %v900 = vpop.f32.mrb[0].mxu0
      %v901 = vpop.f32.mrb[0].mxu0
      %v902 = vadd.f32 %v738, %v901
      %v903 = vpop.f32.mrb[0].mxu0
      %904 = vmatprep.mubr.bf16.mxu0 0
      %905 = vmatmul.mubr.bf16.gmra.mrb[0].mxu0 %v821
      %v906 = vpop.f32.mrb[0].mxu0
      %v907 = vadd.f32 %v743, %v906
      %v908 = vpop.f32.mrb[0].mxu0
      %v909 = vpop.f32.mrb[0].mxu0
      %v910 = vadd.f32 %v746, %v909
      %v911 = vpop.f32.mrb[0].mxu0
      %912 = vmatprep.mubr.bf16.mxu0 0
      %913 = vmatmul.mubr.bf16.gmra.mrb[0].mxu0 %v824
      %v914 = vpop.f32.mrb[0].mxu0
      %v915 = vadd.f32 %v751, %v914
      %v916 = vpop.f32.mrb[0].mxu0
      %v917 = vpop.f32.mrb[0].mxu0
      %v918 = vadd.f32 %v754, %v917
      %v919 = vpop.f32.mrb[0].mxu0
      %920 = vmatprep.mubr.bf16.mxu0 0
      %921 = vmatmul.mubr.bf16.gmra.mrb[0].mxu0 %v827
      %v922 = vpop.f32.mrb[0].mxu0
      %v923 = vadd.f32 %v759, %v922
      %v924 = vpop.f32.mrb[0].mxu0
      %v925 = vpop.f32.mrb[0].mxu0
      %v926 = vadd.f32 %v762, %v925
      %v927 = vpop.f32.mrb[0].mxu0
      %928 = vdwg.mxu0
      %vm937 = vcmask 1042432
      %vm938 = vcmask 1046532
      %vm939 = vmor %vm937, %vm938
      %v940 = vrot.slane %v384, 5
      %v941 = vrot.slane %v940, 4
      %v942 = vrot.slane %v385, 5
      %v943 = vsel %vm939, %v941, %v942
      %v944 = vrot.slane %v942, 4
      %v945 = vrot.slane %v386, 5
      %v946 = vsel %vm939, %v944, %v945
      %v947 = vrot.slane %v387, 5
      %v948 = vrot.slane %v947, 4
      %v949 = vrot.slane %v388, 5
      %v950 = vsel %vm939, %v948, %v949
      %v951 = vrot.slane %v949, 4
      %v952 = vrot.slane %v389, 5
      %v953 = vsel %vm939, %v951, %v952
      %v954 = vrot.slane %v390, 5
      %v955 = vrot.slane %v954, 4
      %v956 = vrot.slane %v391, 5
      %v957 = vsel %vm939, %v955, %v956
      %v958 = vrot.slane %v956, 4
      %v959 = vrot.slane %v392, 5
      %v960 = vsel %vm939, %v958, %v959
      %v961 = vrot.slane %v393, 5
      %v962 = vrot.slane %v961, 4
      %v963 = vrot.slane %v394, 5
      %v964 = vsel %vm939, %v962, %v963
      %v965 = vrot.slane %v963, 4
      %v966 = vrot.slane %v395, 5
      %v967 = vsel %vm939, %v965, %v966
      %v968 = vrot.slane %v396, 5
      %v969 = vrot.slane %v968, 4
      %v970 = vrot.slane %v397, 5
      %v971 = vsel %vm939, %v969, %v970
      %v972 = vrot.slane %v970, 4
      %v973 = vrot.slane %v398, 5
      %v974 = vsel %vm939, %v972, %v973
      %v975 = vrot.slane %v399, 5
      %v976 = vrot.slane %v975, 4
      %v977 = vrot.slane %v400, 5
      %v978 = vsel %vm939, %v976, %v977
      %v979 = vrot.slane %v977, 4
      %v980 = vrot.slane %v401, 5
      %v981 = vsel %vm939, %v979, %v980
      %v982 = vrot.slane %v402, 5
      %v983 = vrot.slane %v982, 4
      %v984 = vrot.slane %v403, 5
      %v985 = vsel %vm939, %v983, %v984
      %v986 = vrot.slane %v984, 4
      %v987 = vrot.slane %v404, 5
      %v988 = vsel %vm939, %v986, %v987
      %v989 = vrot.slane %v405, 5
      %v990 = vrot.slane %v989, 4
      %v991 = vrot.slane %v406, 5
      %v992 = vsel %vm939, %v990, %v991
      %v993 = vrot.slane %v991, 4
      %v994 = vrot.slane %v407, 5
      %v995 = vsel %vm939, %v993, %v994
      %s996 = scalar_lea.vmem %s2, 4
      %v997 = vld [vmem:[%s996] sm:$0x3]
      %v998 = vunpack.c.l.b16 %v943
      %v999 = vunpack.c.l.b16 %v946
      %v1000 = vunpack.c.l.b16 %v950
      %v1001 = vunpack.c.l.b16 %v953
      %v1002 = vunpack.c.l.b16 %v957
      %v1003 = vunpack.c.l.b16 %v960
      %v1004 = vunpack.c.l.b16 %v964
      %v1005 = vunpack.c.l.b16 %v967
      %v1006 = vunpack.c.l.b16 %v971
      %v1007 = vunpack.c.l.b16 %v974
      %v1008 = vunpack.c.l.b16 %v978
      %v1009 = vunpack.c.l.b16 %v981
      %v1010 = vunpack.c.l.b16 %v985
      %v1011 = vunpack.c.l.b16 %v988
      %v1012 = vunpack.c.l.b16 %v992
      %v1013 = vunpack.c.l.b16 %v995
      %v1014 = vpack.c.b16 %v999, %v998
      %v1015 = vpack.c.b16 %v1001, %v1000
      %v1016 = vpack.c.b16 %v1003, %v1002
      %v1017 = vpack.c.b16 %v1005, %v1004
      %v1018 = vpack.c.b16 %v1007, %v1006
      %v1019 = vpack.c.b16 %v1009, %v1008
      %v1020 = vpack.c.b16 %v1011, %v1010
      %v1021 = vpack.c.b16 %v1013, %v1012
      %v1023 = vsel %vm636, %v1014, 0
      %v1026 = vsel %vm636, %v1015, 0
      %v1029 = vsel %vm636, %v1016, 0
      %v1032 = vsel %vm636, %v1017, 0
      %v1035 = vsel %vm636, %v1018, 0
      %v1038 = vsel %vm636, %v1019, 0
      %v1041 = vsel %vm636, %v1020, 0
      %v1044 = vsel %vm636, %v1021, 0
      %v1047 = vand.u32 %v997, %v664
      %1049 = vmatprep.subr.bf16.mxu0 0
      %1050 = vmatpush1.bf16.msra.mxu0 %v1047
      %1051 = vmatprep.subr.bf16.mxu0 0
      %1052 = vmatpush1.bf16.msra.mxu0 0
      %1053 = vmatprep.subr.bf16.mxu0 0
      %1054 = vmatpush1.bf16.msra.mxu0 0
      %1055 = vmatprep.subr.bf16.mxu0 0
      %1056 = vmatpush1.bf16.msra.mxu0 0
      %1057 = vmatprep.subr.bf16.mxu0 0
      %1058 = vmatpush1.bf16.msra.mxu0 0
      %1059 = vmatprep.subr.bf16.mxu0 0
      %1060 = vmatpush1.bf16.msra.mxu0 0
      %1061 = vmatprep.subr.bf16.mxu0 0
      %1062 = vmatpush1.bf16.msra.mxu0 0
      %1063 = vmatprep.subr.bf16.mxu0 0
      %1064 = vmatpush1.bf16.msra.mxu0 0
      %1065 = vmatprep.subr.bf16.mxu0 0
      %1066 = vmatpush1.bf16.msra.mxu0 0
      %1067 = vmatprep.subr.bf16.mxu0 0
      %1068 = vmatpush1.bf16.msra.mxu0 0
      %1069 = vmatprep.subr.bf16.mxu0 0
      %1070 = vmatpush1.bf16.msra.mxu0 0
      %1071 = vmatprep.subr.bf16.mxu0 0
      %1072 = vmatpush1.bf16.msra.mxu0 0
      %1073 = vmatprep.subr.bf16.mxu0 0
      %1074 = vmatpush1.bf16.msra.mxu0 0
      %1075 = vmatprep.subr.bf16.mxu0 0
      %1076 = vmatpush1.bf16.msra.mxu0 0
      %1077 = vmatprep.subr.bf16.mxu0 0
      %1078 = vmatpush1.bf16.msra.mxu0 0
      %1079 = vmatprep.subr.bf16.mxu0 0
      %1080 = vmatpush1.bf16.msra.mxu0 0
      %1081 = vmatprep.mubr.bf16.mxu0 0
      %1082 = vmatmul.mubr.bf16.gmra.mrb[0].mxu0 %v1023
      %v1083 = vpop.f32.mrb[0].mxu0
      %v1084 = vadd.f32 0.0, %v1083
      %v1085 = vpop.f32.mrb[0].mxu0
      %v1086 = vpop.f32.mrb[0].mxu0
      %v1087 = vadd.f32 0.0, %v1086
      %v1088 = vpop.f32.mrb[0].mxu0
      %1089 = vmatprep.mubr.bf16.mxu0 0
      %1090 = vmatmul.mubr.bf16.gmra.mrb[0].mxu0 %v1026
      %v1091 = vpop.f32.mrb[0].mxu0
      %v1092 = vadd.f32 0.0, %v1091
      %v1093 = vpop.f32.mrb[0].mxu0
      %v1094 = vpop.f32.mrb[0].mxu0
      %v1095 = vadd.f32 0.0, %v1094
      %v1096 = vpop.f32.mrb[0].mxu0
      %1097 = vmatprep.mubr.bf16.mxu0 0
      %1098 = vmatmul.mubr.bf16.gmra.mrb[0].mxu0 %v1029
      %v1099 = vpop.f32.mrb[0].mxu0
      %v1100 = vadd.f32 0.0, %v1099
      %v1101 = vpop.f32.mrb[0].mxu0
      %v1102 = vpop.f32.mrb[0].mxu0
      %v1103 = vadd.f32 0.0, %v1102
      %v1104 = vpop.f32.mrb[0].mxu0
      %1105 = vmatprep.mubr.bf16.mxu0 0
      %1106 = vmatmul.mubr.bf16.gmra.mrb[0].mxu0 %v1032
      %v1107 = vpop.f32.mrb[0].mxu0
      %v1108 = vadd.f32 0.0, %v1107
      %v1109 = vpop.f32.mrb[0].mxu0
      %v1110 = vpop.f32.mrb[0].mxu0
      %v1111 = vadd.f32 0.0, %v1110
      %v1112 = vpop.f32.mrb[0].mxu0
      %1113 = vmatprep.mubr.bf16.mxu0 0
      %1114 = vmatmul.mubr.bf16.gmra.mrb[0].mxu0 %v1035
      %v1115 = vpop.f32.mrb[0].mxu0
      %v1116 = vadd.f32 0.0, %v1115
      %v1117 = vpop.f32.mrb[0].mxu0
      %v1118 = vpop.f32.mrb[0].mxu0
      %v1119 = vadd.f32 0.0, %v1118
      %v1120 = vpop.f32.mrb[0].mxu0
      %1121 = vmatprep.mubr.bf16.mxu0 0
      %1122 = vmatmul.mubr.bf16.gmra.mrb[0].mxu0 %v1038
      %v1123 = vpop.f32.mrb[0].mxu0
      %v1124 = vadd.f32 0.0, %v1123
      %v1125 = vpop.f32.mrb[0].mxu0
      %v1126 = vpop.f32.mrb[0].mxu0
      %v1127 = vadd.f32 0.0, %v1126
      %v1128 = vpop.f32.mrb[0].mxu0
      %1129 = vmatprep.mubr.bf16.mxu0 0
      %1130 = vmatmul.mubr.bf16.gmra.mrb[0].mxu0 %v1041
      %v1131 = vpop.f32.mrb[0].mxu0
      %v1132 = vadd.f32 0.0, %v1131
      %v1133 = vpop.f32.mrb[0].mxu0
      %v1134 = vpop.f32.mrb[0].mxu0
      %v1135 = vadd.f32 0.0, %v1134
      %v1136 = vpop.f32.mrb[0].mxu0
      %1137 = vmatprep.mubr.bf16.mxu0 0
      %1138 = vmatmul.mubr.bf16.gmra.mrb[0].mxu0 %v1044
      %v1139 = vpop.f32.mrb[0].mxu0
      %v1140 = vadd.f32 0.0, %v1139
      %v1141 = vpop.f32.mrb[0].mxu0
      %v1142 = vpop.f32.mrb[0].mxu0
      %v1143 = vadd.f32 0.0, %v1142
      %v1144 = vpop.f32.mrb[0].mxu0
      %1145 = vdwg.mxu0
      %v1146 = vadd.f32 %v867, %v1084
      %v1147 = vadd.f32 %v870, %v1087
      %v1148 = vadd.f32 %v875, %v1092
      %v1149 = vadd.f32 %v878, %v1095
      %v1150 = vadd.f32 %v883, %v1100
      %v1151 = vadd.f32 %v886, %v1103
      %v1152 = vadd.f32 %v891, %v1108
      %v1153 = vadd.f32 %v894, %v1111
      %v1154 = vadd.f32 %v899, %v1116
      %v1155 = vadd.f32 %v902, %v1119
      %v1156 = vadd.f32 %v907, %v1124
      %v1157 = vadd.f32 %v910, %v1127
      %v1158 = vadd.f32 %v915, %v1132
      %v1159 = vadd.f32 %v918, %v1135
      %v1160 = vadd.f32 %v923, %v1140
      %v1161 = vadd.f32 %v926, %v1143
      %s1162 = scalar_lea.vmem %s2, 6
      %v1163 = vld [vmem:[%s1162] sm:$0x3]
      %v1166 = vunpack.c.l.b16 %v408
      %v1167 = vunpack.c.l.b16 %v409
      %v1168 = vpack.c.b16 %v1167, %v1166
      %v1170 = vsel %vm636, %v1168, 0
      %v1173 = vand.u32 %v1163, %v664
      %1175 = vmatprep.subr.bf16.mxu0 0
      %1176 = vmatpush1.bf16.msra.mxu0 %v1173
      %1177 = vmatprep.subr.bf16.mxu0 0
      %1178 = vmatpush1.bf16.msra.mxu0 0
      %1179 = vmatprep.subr.bf16.mxu0 0
      %1180 = vmatpush1.bf16.msra.mxu0 0
      %1181 = vmatprep.subr.bf16.mxu0 0
      %1182 = vmatpush1.bf16.msra.mxu0 0
      %1183 = vmatprep.subr.bf16.mxu0 0
      %1184 = vmatpush1.bf16.msra.mxu0 0
      %1185 = vmatprep.subr.bf16.mxu0 0
      %1186 = vmatpush1.bf16.msra.mxu0 0
      %1187 = vmatprep.subr.bf16.mxu0 0
      %1188 = vmatpush1.bf16.msra.mxu0 0
      %1189 = vmatprep.subr.bf16.mxu0 0
      %1190 = vmatpush1.bf16.msra.mxu0 0
      %1191 = vmatprep.subr.bf16.mxu0 0
      %1192 = vmatpush1.bf16.msra.mxu0 0
      %1193 = vmatprep.subr.bf16.mxu0 0
      %1194 = vmatpush1.bf16.msra.mxu0 0
      %1195 = vmatprep.subr.bf16.mxu0 0
      %1196 = vmatpush1.bf16.msra.mxu0 0
      %1197 = vmatprep.subr.bf16.mxu0 0
      %1198 = vmatpush1.bf16.msra.mxu0 0
      %1199 = vmatprep.subr.bf16.mxu0 0
      %1200 = vmatpush1.bf16.msra.mxu0 0
      %1201 = vmatprep.subr.bf16.mxu0 0
      %1202 = vmatpush1.bf16.msra.mxu0 0
      %1203 = vmatprep.subr.bf16.mxu0 0
      %1204 = vmatpush1.bf16.msra.mxu0 0
      %1205 = vmatprep.subr.bf16.mxu0 0
      %1206 = vmatpush1.bf16.msra.mxu0 0
      %1207 = vmatprep.mubr.bf16.mxu0 0
      %1208 = vmatmul.mubr.bf16.gmra.mrb[0].mxu0 %v809
      %v1209 = vpop.f32.mrb[0].mxu0
      %v1210 = vadd.f32 0.0, %v1209
      %v1211 = vpop.f32.mrb[0].mxu0
      %v1212 = vpop.f32.mrb[0].mxu0
      %v1213 = vadd.f32 0.0, %v1212
      %v1214 = vpop.f32.mrb[0].mxu0
      %1215 = vmatprep.mubr.bf16.mxu0 0
      %1216 = vmatmul.mubr.bf16.gmra.mrb[0].mxu0 %v812
      %v1217 = vpop.f32.mrb[0].mxu0
      %v1218 = vadd.f32 0.0, %v1217
      %v1219 = vpop.f32.mrb[0].mxu0
      %v1220 = vpop.f32.mrb[0].mxu0
      %v1221 = vadd.f32 0.0, %v1220
      %v1222 = vpop.f32.mrb[0].mxu0
      %1223 = vmatprep.mubr.bf16.mxu0 0
      %1224 = vmatmul.mubr.bf16.gmra.mrb[0].mxu0 %v815
      %v1225 = vpop.f32.mrb[0].mxu0
      %v1226 = vadd.f32 0.0, %v1225
      %v1227 = vpop.f32.mrb[0].mxu0
      %v1228 = vpop.f32.mrb[0].mxu0
      %v1229 = vadd.f32 0.0, %v1228
      %v1230 = vpop.f32.mrb[0].mxu0
      %1231 = vmatprep.mubr.bf16.mxu0 0
      %1232 = vmatmul.mubr.bf16.gmra.mrb[0].mxu0 %v818
      %v1233 = vpop.f32.mrb[0].mxu0
      %v1234 = vadd.f32 0.0, %v1233
      %v1235 = vpop.f32.mrb[0].mxu0
      %v1236 = vpop.f32.mrb[0].mxu0
      %v1237 = vadd.f32 0.0, %v1236
      %v1238 = vpop.f32.mrb[0].mxu0
      %1239 = vmatprep.mubr.bf16.mxu0 0
      %1240 = vmatmul.mubr.bf16.gmra.mrb[0].mxu0 %v821
      %v1241 = vpop.f32.mrb[0].mxu0
      %v1242 = vadd.f32 0.0, %v1241
      %v1243 = vpop.f32.mrb[0].mxu0
      %v1244 = vpop.f32.mrb[0].mxu0
      %v1245 = vadd.f32 0.0, %v1244
      %v1246 = vpop.f32.mrb[0].mxu0
      %1247 = vmatprep.mubr.bf16.mxu0 0
      %1248 = vmatmul.mubr.bf16.gmra.mrb[0].mxu0 %v824
      %v1249 = vpop.f32.mrb[0].mxu0
      %v1250 = vadd.f32 0.0, %v1249
      %v1251 = vpop.f32.mrb[0].mxu0
      %v1252 = vpop.f32.mrb[0].mxu0
      %v1253 = vadd.f32 0.0, %v1252
      %v1254 = vpop.f32.mrb[0].mxu0
      %1255 = vmatprep.mubr.bf16.mxu0 0
      %1256 = vmatmul.mubr.bf16.gmra.mrb[0].mxu0 %v827
      %v1257 = vpop.f32.mrb[0].mxu0
      %v1258 = vadd.f32 0.0, %v1257
      %v1259 = vpop.f32.mrb[0].mxu0
      %v1260 = vpop.f32.mrb[0].mxu0
      %v1261 = vadd.f32 0.0, %v1260
      %v1262 = vpop.f32.mrb[0].mxu0
      %1263 = vmatprep.mubr.bf16.mxu0 0
      %1264 = vmatmul.mubr.bf16.gmra.mrb[0].mxu0 %v1170
      %v1265 = vpop.f32.mrb[0].mxu0
      %v1266 = vadd.f32 0.0, %v1265
      %v1267 = vpop.f32.mrb[0].mxu0
      %v1268 = vpop.f32.mrb[0].mxu0
      %v1269 = vadd.f32 0.0, %v1268
      %v1270 = vpop.f32.mrb[0].mxu0
      %1271 = vdwg.mxu0
      %v1272 = vadd.f32 %v1146, %v1210
      %v1273 = vadd.f32 %v1147, %v1213
      %v1274 = vadd.f32 %v1148, %v1218
      %v1275 = vadd.f32 %v1149, %v1221
      %v1276 = vadd.f32 %v1150, %v1226
      %v1277 = vadd.f32 %v1151, %v1229
      %v1278 = vadd.f32 %v1152, %v1234
      %v1279 = vadd.f32 %v1153, %v1237
      %v1280 = vadd.f32 %v1154, %v1242
      %v1281 = vadd.f32 %v1155, %v1245
      %v1282 = vadd.f32 %v1156, %v1250
      %v1283 = vadd.f32 %v1157, %v1253
      %v1284 = vadd.f32 %v1158, %v1258
      %v1285 = vadd.f32 %v1159, %v1261
      %v1286 = vadd.f32 %v1160, %v1266
      %v1287 = vadd.f32 %v1161, %v1269
      %v1289 = vshrl.u32 %v408, 16
      %v1291 = vrot.slane %v1289, 4
      %v1292 = vshll.u32 %v408, 16
      %v1294 = vrot.slane %v1292, 5
      %v1295 = vor.u32 %v1291, %v1294
      %v1296 = vrot.slane %v1295, 4
      %v1298 = vshll.u32 %v409, 16
      %v1300 = vrot.slane %v1298, 5
      %v1301 = vsel %vm417, %v1296, %v1300
      %v1302 = vshrl.u32 %v409, 16
      %v1304 = vrot.slane %v1302, 4
      %v1305 = vor.u32 %v1304, %v1300
      %v1306 = vrot.slane %v1305, 4
      %v1308 = vshll.u32 %v410, 16
      %v1310 = vrot.slane %v1308, 5
      %v1311 = vsel %vm417, %v1306, %v1310
      %s1312 = scalar_lea.vmem %s2, 8
      %v1313 = vld [vmem:[%s1312] sm:$0x3]
      %v1314 = vunpack.c.l.b16 %v1301
      %v1315 = vunpack.c.l.b16 %v1311
      %v1316 = vpack.c.b16 %v1315, %v1314
      %v1318 = vsel %vm636, %v1316, 0
      %v1321 = vand.u32 %v1313, %v664
      %1323 = vmatprep.subr.bf16.mxu0 0
      %1324 = vmatpush1.bf16.msra.mxu0 %v1321
      %1325 = vmatprep.subr.bf16.mxu0 0
      %1326 = vmatpush1.bf16.msra.mxu0 0
      %1327 = vmatprep.subr.bf16.mxu0 0
      %1328 = vmatpush1.bf16.msra.mxu0 0
      %1329 = vmatprep.subr.bf16.mxu0 0
      %1330 = vmatpush1.bf16.msra.mxu0 0
      %1331 = vmatprep.subr.bf16.mxu0 0
      %1332 = vmatpush1.bf16.msra.mxu0 0
      %1333 = vmatprep.subr.bf16.mxu0 0
      %1334 = vmatpush1.bf16.msra.mxu0 0
      %1335 = vmatprep.subr.bf16.mxu0 0
      %1336 = vmatpush1.bf16.msra.mxu0 0
      %1337 = vmatprep.subr.bf16.mxu0 0
      %1338 = vmatpush1.bf16.msra.mxu0 0
      %1339 = vmatprep.subr.bf16.mxu0 0
      %1340 = vmatpush1.bf16.msra.mxu0 0
      %1341 = vmatprep.subr.bf16.mxu0 0
      %1342 = vmatpush1.bf16.msra.mxu0 0
      %1343 = vmatprep.subr.bf16.mxu0 0
      %1344 = vmatpush1.bf16.msra.mxu0 0
      %1345 = vmatprep.subr.bf16.mxu0 0
      %1346 = vmatpush1.bf16.msra.mxu0 0
      %1347 = vmatprep.subr.bf16.mxu0 0
      %1348 = vmatpush1.bf16.msra.mxu0 0
      %1349 = vmatprep.subr.bf16.mxu0 0
      %1350 = vmatpush1.bf16.msra.mxu0 0
      %1351 = vmatprep.subr.bf16.mxu0 0
      %1352 = vmatpush1.bf16.msra.mxu0 0
      %1353 = vmatprep.subr.bf16.mxu0 0
      %1354 = vmatpush1.bf16.msra.mxu0 0
      %1355 = vmatprep.mubr.bf16.mxu0 0
      %1356 = vmatmul.mubr.bf16.gmra.mrb[0].mxu0 %v641
      %v1357 = vpop.f32.mrb[0].mxu0
      %v1358 = vadd.f32 0.0, %v1357
      %v1359 = vpop.f32.mrb[0].mxu0
      %v1360 = vpop.f32.mrb[0].mxu0
      %v1361 = vadd.f32 0.0, %v1360
      %v1362 = vpop.f32.mrb[0].mxu0
      %1363 = vmatprep.mubr.bf16.mxu0 0
      %1364 = vmatmul.mubr.bf16.gmra.mrb[0].mxu0 %v644
      %v1365 = vpop.f32.mrb[0].mxu0
      %v1366 = vadd.f32 0.0, %v1365
      %v1367 = vpop.f32.mrb[0].mxu0
      %v1368 = vpop.f32.mrb[0].mxu0
      %v1369 = vadd.f32 0.0, %v1368
      %v1370 = vpop.f32.mrb[0].mxu0
      %1371 = vmatprep.mubr.bf16.mxu0 0
      %1372 = vmatmul.mubr.bf16.gmra.mrb[0].mxu0 %v647
      %v1373 = vpop.f32.mrb[0].mxu0
      %v1374 = vadd.f32 0.0, %v1373
      %v1375 = vpop.f32.mrb[0].mxu0
      %v1376 = vpop.f32.mrb[0].mxu0
      %v1377 = vadd.f32 0.0, %v1376
      %v1378 = vpop.f32.mrb[0].mxu0
      %1379 = vmatprep.mubr.bf16.mxu0 0
      %1380 = vmatmul.mubr.bf16.gmra.mrb[0].mxu0 %v650
      %v1381 = vpop.f32.mrb[0].mxu0
      %v1382 = vadd.f32 0.0, %v1381
      %v1383 = vpop.f32.mrb[0].mxu0
      %v1384 = vpop.f32.mrb[0].mxu0
      %v1385 = vadd.f32 0.0, %v1384
      %v1386 = vpop.f32.mrb[0].mxu0
      %1387 = vmatprep.mubr.bf16.mxu0 0
      %1388 = vmatmul.mubr.bf16.gmra.mrb[0].mxu0 %v653
      %v1389 = vpop.f32.mrb[0].mxu0
      %v1390 = vadd.f32 0.0, %v1389
      %v1391 = vpop.f32.mrb[0].mxu0
      %v1392 = vpop.f32.mrb[0].mxu0
      %v1393 = vadd.f32 0.0, %v1392
      %v1394 = vpop.f32.mrb[0].mxu0
      %1395 = vmatprep.mubr.bf16.mxu0 0
      %1396 = vmatmul.mubr.bf16.gmra.mrb[0].mxu0 %v656
      %v1397 = vpop.f32.mrb[0].mxu0
      %v1398 = vadd.f32 0.0, %v1397
      %v1399 = vpop.f32.mrb[0].mxu0
      %v1400 = vpop.f32.mrb[0].mxu0
      %v1401 = vadd.f32 0.0, %v1400
      %v1402 = vpop.f32.mrb[0].mxu0
      %1403 = vmatprep.mubr.bf16.mxu0 0
      %1404 = vmatmul.mubr.bf16.gmra.mrb[0].mxu0 %v659
      %v1405 = vpop.f32.mrb[0].mxu0
      %v1406 = vadd.f32 0.0, %v1405
      %v1407 = vpop.f32.mrb[0].mxu0
      %v1408 = vpop.f32.mrb[0].mxu0
      %v1409 = vadd.f32 0.0, %v1408
      %v1410 = vpop.f32.mrb[0].mxu0
      %1411 = vmatprep.mubr.bf16.mxu0 0
      %1412 = vmatmul.mubr.bf16.gmra.mrb[0].mxu0 %v1318
      %v1413 = vpop.f32.mrb[0].mxu0
      %v1414 = vadd.f32 0.0, %v1413
      %v1415 = vpop.f32.mrb[0].mxu0
      %v1416 = vpop.f32.mrb[0].mxu0
      %v1417 = vadd.f32 0.0, %v1416
      %v1418 = vpop.f32.mrb[0].mxu0
      %1419 = vdwg.mxu0
      %v1420 = vadd.f32 %v1272, %v1358
      %v1421 = vadd.f32 %v1273, %v1361
      %v1422 = vadd.f32 %v1274, %v1366
      %v1423 = vadd.f32 %v1275, %v1369
      %v1424 = vadd.f32 %v1276, %v1374
      %v1425 = vadd.f32 %v1277, %v1377
      %v1426 = vadd.f32 %v1278, %v1382
      %v1427 = vadd.f32 %v1279, %v1385
      %v1428 = vadd.f32 %v1280, %v1390
      %v1429 = vadd.f32 %v1281, %v1393
      %v1430 = vadd.f32 %v1282, %v1398
      %v1431 = vadd.f32 %v1283, %v1401
      %v1432 = vadd.f32 %v1284, %v1406
      %v1433 = vadd.f32 %v1285, %v1409
      %v1434 = vadd.f32 %v1286, %v1414
      %v1435 = vadd.f32 %v1287, %v1417
      %v1437 = vrot.slane %v408, 5
      %v1438 = vrot.slane %v1437, 4
      %v1439 = vrot.slane %v409, 5
      %v1440 = vsel %vm939, %v1438, %v1439
      %v1441 = vrot.slane %v1439, 4
      %v1442 = vrot.slane %v410, 5
      %v1443 = vsel %vm939, %v1441, %v1442
      %s1444 = scalar_lea.vmem %s2, 10
      %v1445 = vld [vmem:[%s1444] sm:$0x3]
      %v1446 = vunpack.c.l.b16 %v1440
      %v1447 = vunpack.c.l.b16 %v1443
      %v1448 = vpack.c.b16 %v1447, %v1446
      %v1450 = vsel %vm636, %v1448, 0
      %v1453 = vand.u32 %v1445, %v664
      %1455 = vmatprep.subr.bf16.mxu0 0
      %1456 = vmatpush1.bf16.msra.mxu0 %v1453
      %1457 = vmatprep.subr.bf16.mxu0 0
      %1458 = vmatpush1.bf16.msra.mxu0 0
      %1459 = vmatprep.subr.bf16.mxu0 0
      %1460 = vmatpush1.bf16.msra.mxu0 0
      %1461 = vmatprep.subr.bf16.mxu0 0
      %1462 = vmatpush1.bf16.msra.mxu0 0
      %1463 = vmatprep.subr.bf16.mxu0 0
      %1464 = vmatpush1.bf16.msra.mxu0 0
      %1465 = vmatprep.subr.bf16.mxu0 0
      %1466 = vmatpush1.bf16.msra.mxu0 0
      %1467 = vmatprep.subr.bf16.mxu0 0
      %1468 = vmatpush1.bf16.msra.mxu0 0
      %1469 = vmatprep.subr.bf16.mxu0 0
      %1470 = vmatpush1.bf16.msra.mxu0 0
      %1471 = vmatprep.subr.bf16.mxu0 0
      %1472 = vmatpush1.bf16.msra.mxu0 0
      %1473 = vmatprep.subr.bf16.mxu0 0
      %1474 = vmatpush1.bf16.msra.mxu0 0
      %1475 = vmatprep.subr.bf16.mxu0 0
      %1476 = vmatpush1.bf16.msra.mxu0 0
      %1477 = vmatprep.subr.bf16.mxu0 0
      %1478 = vmatpush1.bf16.msra.mxu0 0
      %1479 = vmatprep.subr.bf16.mxu0 0
      %1480 = vmatpush1.bf16.msra.mxu0 0
      %1481 = vmatprep.subr.bf16.mxu0 0
      %1482 = vmatpush1.bf16.msra.mxu0 0
      %1483 = vmatprep.subr.bf16.mxu0 0
      %1484 = vmatpush1.bf16.msra.mxu0 0
      %1485 = vmatprep.subr.bf16.mxu0 0
      %1486 = vmatpush1.bf16.msra.mxu0 0
      %1487 = vmatprep.mubr.bf16.mxu0 0
      %1488 = vmatmul.mubr.bf16.gmra.mrb[0].mxu0 %v1026
      %v1489 = vpop.f32.mrb[0].mxu0
      %v1490 = vadd.f32 0.0, %v1489
      %v1491 = vpop.f32.mrb[0].mxu0
      %v1492 = vpop.f32.mrb[0].mxu0
      %v1493 = vadd.f32 0.0, %v1492
      %v1494 = vpop.f32.mrb[0].mxu0
      %1495 = vmatprep.mubr.bf16.mxu0 0
      %1496 = vmatmul.mubr.bf16.gmra.mrb[0].mxu0 %v1029
      %v1497 = vpop.f32.mrb[0].mxu0
      %v1498 = vadd.f32 0.0, %v1497
      %v1499 = vpop.f32.mrb[0].mxu0
      %v1500 = vpop.f32.mrb[0].mxu0
      %v1501 = vadd.f32 0.0, %v1500
      %v1502 = vpop.f32.mrb[0].mxu0
      %1503 = vmatprep.mubr.bf16.mxu0 0
      %1504 = vmatmul.mubr.bf16.gmra.mrb[0].mxu0 %v1032
      %v1505 = vpop.f32.mrb[0].mxu0
      %v1506 = vadd.f32 0.0, %v1505
      %v1507 = vpop.f32.mrb[0].mxu0
      %v1508 = vpop.f32.mrb[0].mxu0
      %v1509 = vadd.f32 0.0, %v1508
      %v1510 = vpop.f32.mrb[0].mxu0
      %1511 = vmatprep.mubr.bf16.mxu0 0
      %1512 = vmatmul.mubr.bf16.gmra.mrb[0].mxu0 %v1035
      %v1513 = vpop.f32.mrb[0].mxu0
      %v1514 = vadd.f32 0.0, %v1513
      %v1515 = vpop.f32.mrb[0].mxu0
      %v1516 = vpop.f32.mrb[0].mxu0
      %v1517 = vadd.f32 0.0, %v1516
      %v1518 = vpop.f32.mrb[0].mxu0
      %1519 = vmatprep.mubr.bf16.mxu0 0
      %1520 = vmatmul.mubr.bf16.gmra.mrb[0].mxu0 %v1038
      %v1521 = vpop.f32.mrb[0].mxu0
      %v1522 = vadd.f32 0.0, %v1521
      %v1523 = vpop.f32.mrb[0].mxu0
      %v1524 = vpop.f32.mrb[0].mxu0
      %v1525 = vadd.f32 0.0, %v1524
      %v1526 = vpop.f32.mrb[0].mxu0
      %1527 = vmatprep.mubr.bf16.mxu0 0
      %1528 = vmatmul.mubr.bf16.gmra.mrb[0].mxu0 %v1041
      %v1529 = vpop.f32.mrb[0].mxu0
      %v1530 = vadd.f32 0.0, %v1529
      %v1531 = vpop.f32.mrb[0].mxu0
      %v1532 = vpop.f32.mrb[0].mxu0
      %v1533 = vadd.f32 0.0, %v1532
      %v1534 = vpop.f32.mrb[0].mxu0
      %1535 = vmatprep.mubr.bf16.mxu0 0
      %1536 = vmatmul.mubr.bf16.gmra.mrb[0].mxu0 %v1044
      %v1537 = vpop.f32.mrb[0].mxu0
      %v1538 = vadd.f32 0.0, %v1537
      %v1539 = vpop.f32.mrb[0].mxu0
      %v1540 = vpop.f32.mrb[0].mxu0
      %v1541 = vadd.f32 0.0, %v1540
      %v1542 = vpop.f32.mrb[0].mxu0
      %1543 = vmatprep.mubr.bf16.mxu0 0
      %1544 = vmatmul.mubr.bf16.gmra.mrb[0].mxu0 %v1450
      %v1545 = vpop.f32.mrb[0].mxu0
      %v1546 = vadd.f32 0.0, %v1545
      %v1547 = vpop.f32.mrb[0].mxu0
      %v1548 = vpop.f32.mrb[0].mxu0
      %v1549 = vadd.f32 0.0, %v1548
      %v1550 = vpop.f32.mrb[0].mxu0
      %1551 = vdwg.mxu0
      %v1552 = vadd.f32 %v1420, %v1490
      %v1553 = vadd.f32 %v1421, %v1493
      %v1554 = vadd.f32 %v1422, %v1498
      %v1555 = vadd.f32 %v1423, %v1501
      %v1556 = vadd.f32 %v1424, %v1506
      %v1557 = vadd.f32 %v1425, %v1509
      %v1558 = vadd.f32 %v1426, %v1514
      %v1559 = vadd.f32 %v1427, %v1517
      %v1560 = vadd.f32 %v1428, %v1522
      %v1561 = vadd.f32 %v1429, %v1525
      %v1562 = vadd.f32 %v1430, %v1530
      %v1563 = vadd.f32 %v1431, %v1533
      %v1564 = vadd.f32 %v1432, %v1538
      %v1565 = vadd.f32 %v1433, %v1541
      %v1566 = vadd.f32 %v1434, %v1546
      %v1567 = vadd.f32 %v1435, %v1549
      %s1568 = scalar_lea.vmem %s2, 12
      %v1569 = vld [vmem:[%s1568] sm:$0x3]
      %v1572 = vunpack.c.l.b16 %v411
      %v1573 = vunpack.c.l.b16 %v412
      %v1574 = vpack.c.b16 %v1573, %v1572
      %v1576 = vsel %vm636, %v1574, 0
      %v1579 = vand.u32 %v1569, %v664
      %1581 = vmatprep.subr.bf16.mxu0 0
      %1582 = vmatpush1.bf16.msra.mxu0 %v1579
      %1583 = vmatprep.subr.bf16.mxu0 0
      %1584 = vmatpush1.bf16.msra.mxu0 0
      %1585 = vmatprep.subr.bf16.mxu0 0
      %1586 = vmatpush1.bf16.msra.mxu0 0
      %1587 = vmatprep.subr.bf16.mxu0 0
      %1588 = vmatpush1.bf16.msra.mxu0 0
      %1589 = vmatprep.subr.bf16.mxu0 0
      %1590 = vmatpush1.bf16.msra.mxu0 0
      %1591 = vmatprep.subr.bf16.mxu0 0
      %1592 = vmatpush1.bf16.msra.mxu0 0
      %1593 = vmatprep.subr.bf16.mxu0 0
      %1594 = vmatpush1.bf16.msra.mxu0 0
      %1595 = vmatprep.subr.bf16.mxu0 0
      %1596 = vmatpush1.bf16.msra.mxu0 0
      %1597 = vmatprep.subr.bf16.mxu0 0
      %1598 = vmatpush1.bf16.msra.mxu0 0
      %1599 = vmatprep.subr.bf16.mxu0 0
      %1600 = vmatpush1.bf16.msra.mxu0 0
      %1601 = vmatprep.subr.bf16.mxu0 0
      %1602 = vmatpush1.bf16.msra.mxu0 0
      %1603 = vmatprep.subr.bf16.mxu0 0
      %1604 = vmatpush1.bf16.msra.mxu0 0
      %1605 = vmatprep.subr.bf16.mxu0 0
      %1606 = vmatpush1.bf16.msra.mxu0 0
      %1607 = vmatprep.subr.bf16.mxu0 0
      %1608 = vmatpush1.bf16.msra.mxu0 0
      %1609 = vmatprep.subr.bf16.mxu0 0
      %1610 = vmatpush1.bf16.msra.mxu0 0
      %1611 = vmatprep.subr.bf16.mxu0 0
      %1612 = vmatpush1.bf16.msra.mxu0 0
      %1613 = vmatprep.mubr.bf16.mxu0 0
      %1614 = vmatmul.mubr.bf16.gmra.mrb[0].mxu0 %v812
      %v1615 = vpop.f32.mrb[0].mxu0
      %v1616 = vadd.f32 0.0, %v1615
      %v1617 = vpop.f32.mrb[0].mxu0
      %v1618 = vpop.f32.mrb[0].mxu0
      %v1619 = vadd.f32 0.0, %v1618
      %v1620 = vpop.f32.mrb[0].mxu0
      %1621 = vmatprep.mubr.bf16.mxu0 0
      %1622 = vmatmul.mubr.bf16.gmra.mrb[0].mxu0 %v815
      %v1623 = vpop.f32.mrb[0].mxu0
      %v1624 = vadd.f32 0.0, %v1623
      %v1625 = vpop.f32.mrb[0].mxu0
      %v1626 = vpop.f32.mrb[0].mxu0
      %v1627 = vadd.f32 0.0, %v1626
      %v1628 = vpop.f32.mrb[0].mxu0
      %1629 = vmatprep.mubr.bf16.mxu0 0
      %1630 = vmatmul.mubr.bf16.gmra.mrb[0].mxu0 %v818
      %v1631 = vpop.f32.mrb[0].mxu0
      %v1632 = vadd.f32 0.0, %v1631
      %v1633 = vpop.f32.mrb[0].mxu0
      %v1634 = vpop.f32.mrb[0].mxu0
      %v1635 = vadd.f32 0.0, %v1634
      %v1636 = vpop.f32.mrb[0].mxu0
      %1637 = vmatprep.mubr.bf16.mxu0 0
      %1638 = vmatmul.mubr.bf16.gmra.mrb[0].mxu0 %v821
      %v1639 = vpop.f32.mrb[0].mxu0
      %v1640 = vadd.f32 0.0, %v1639
      %v1641 = vpop.f32.mrb[0].mxu0
      %v1642 = vpop.f32.mrb[0].mxu0
      %v1643 = vadd.f32 0.0, %v1642
      %v1644 = vpop.f32.mrb[0].mxu0
      %1645 = vmatprep.mubr.bf16.mxu0 0
      %1646 = vmatmul.mubr.bf16.gmra.mrb[0].mxu0 %v824
      %v1647 = vpop.f32.mrb[0].mxu0
      %v1648 = vadd.f32 0.0, %v1647
      %v1649 = vpop.f32.mrb[0].mxu0
      %v1650 = vpop.f32.mrb[0].mxu0
      %v1651 = vadd.f32 0.0, %v1650
      %v1652 = vpop.f32.mrb[0].mxu0
      %1653 = vmatprep.mubr.bf16.mxu0 0
      %1654 = vmatmul.mubr.bf16.gmra.mrb[0].mxu0 %v827
      %v1655 = vpop.f32.mrb[0].mxu0
      %v1656 = vadd.f32 0.0, %v1655
      %v1657 = vpop.f32.mrb[0].mxu0
      %v1658 = vpop.f32.mrb[0].mxu0
      %v1659 = vadd.f32 0.0, %v1658
      %v1660 = vpop.f32.mrb[0].mxu0
      %1661 = vmatprep.mubr.bf16.mxu0 0
      %1662 = vmatmul.mubr.bf16.gmra.mrb[0].mxu0 %v1170
      %v1663 = vpop.f32.mrb[0].mxu0
      %v1664 = vadd.f32 0.0, %v1663
      %v1665 = vpop.f32.mrb[0].mxu0
      %v1666 = vpop.f32.mrb[0].mxu0
      %v1667 = vadd.f32 0.0, %v1666
      %v1668 = vpop.f32.mrb[0].mxu0
      %1669 = vmatprep.mubr.bf16.mxu0 0
      %1670 = vmatmul.mubr.bf16.gmra.mrb[0].mxu0 %v1576
      %v1671 = vpop.f32.mrb[0].mxu0
      %v1672 = vadd.f32 0.0, %v1671
      %v1673 = vpop.f32.mrb[0].mxu0
      %v1674 = vpop.f32.mrb[0].mxu0
      %v1675 = vadd.f32 0.0, %v1674
      %v1676 = vpop.f32.mrb[0].mxu0
      %1677 = vdwg.mxu0
      %v1678 = vadd.f32 %v1552, %v1616
      %v1679 = vadd.f32 %v1553, %v1619
      %v1680 = vadd.f32 %v1554, %v1624
      %v1681 = vadd.f32 %v1555, %v1627
      %v1682 = vadd.f32 %v1556, %v1632
      %v1683 = vadd.f32 %v1557, %v1635
      %v1684 = vadd.f32 %v1558, %v1640
      %v1685 = vadd.f32 %v1559, %v1643
      %v1686 = vadd.f32 %v1560, %v1648
      %v1687 = vadd.f32 %v1561, %v1651
      %v1688 = vadd.f32 %v1562, %v1656
      %v1689 = vadd.f32 %v1563, %v1659
      %v1690 = vadd.f32 %v1564, %v1664
      %v1691 = vadd.f32 %v1565, %v1667
      %v1692 = vadd.f32 %v1566, %v1672
      %v1693 = vadd.f32 %v1567, %v1675
      %v1695 = vshrl.u32 %v411, 16
      %v1697 = vrot.slane %v1695, 4
      %v1698 = vshll.u32 %v411, 16
      %v1700 = vrot.slane %v1698, 5
      %v1701 = vor.u32 %v1697, %v1700
      %v1702 = vrot.slane %v1701, 4
      %v1704 = vshll.u32 %v412, 16
      %v1706 = vrot.slane %v1704, 5
      %v1707 = vsel %vm417, %v1702, %v1706
      %v1708 = vshrl.u32 %v412, 16
      %v1710 = vrot.slane %v1708, 4
      %v1711 = vor.u32 %v1710, %v1706
      %v1712 = vrot.slane %v1711, 4
      %v1714 = vshll.u32 %v413, 16
      %v1716 = vrot.slane %v1714, 5
      %v1717 = vsel %vm417, %v1712, %v1716
      %s1718 = scalar_lea.vmem %s2, 14
      %v1719 = vld [vmem:[%s1718] sm:$0x3]
      %v1720 = vunpack.c.l.b16 %v1707
      %v1721 = vunpack.c.l.b16 %v1717
      %v1722 = vpack.c.b16 %v1721, %v1720
      %v1724 = vsel %vm636, %v1722, 0
      %v1727 = vand.u32 %v1719, %v664
      %1729 = vmatprep.subr.bf16.mxu0 0
      %1730 = vmatpush1.bf16.msra.mxu0 %v1727
      %1731 = vmatprep.subr.bf16.mxu0 0
      %1732 = vmatpush1.bf16.msra.mxu0 0
      %1733 = vmatprep.subr.bf16.mxu0 0
      %1734 = vmatpush1.bf16.msra.mxu0 0
      %1735 = vmatprep.subr.bf16.mxu0 0
      %1736 = vmatpush1.bf16.msra.mxu0 0
      %1737 = vmatprep.subr.bf16.mxu0 0
      %1738 = vmatpush1.bf16.msra.mxu0 0
      %1739 = vmatprep.subr.bf16.mxu0 0
      %1740 = vmatpush1.bf16.msra.mxu0 0
      %1741 = vmatprep.subr.bf16.mxu0 0
      %1742 = vmatpush1.bf16.msra.mxu0 0
      %1743 = vmatprep.subr.bf16.mxu0 0
      %1744 = vmatpush1.bf16.msra.mxu0 0
      %1745 = vmatprep.subr.bf16.mxu0 0
      %1746 = vmatpush1.bf16.msra.mxu0 0
      %1747 = vmatprep.subr.bf16.mxu0 0
      %1748 = vmatpush1.bf16.msra.mxu0 0
      %1749 = vmatprep.subr.bf16.mxu0 0
      %1750 = vmatpush1.bf16.msra.mxu0 0
      %1751 = vmatprep.subr.bf16.mxu0 0
      %1752 = vmatpush1.bf16.msra.mxu0 0
      %1753 = vmatprep.subr.bf16.mxu0 0
      %1754 = vmatpush1.bf16.msra.mxu0 0
      %1755 = vmatprep.subr.bf16.mxu0 0
      %1756 = vmatpush1.bf16.msra.mxu0 0
      %1757 = vmatprep.subr.bf16.mxu0 0
      %1758 = vmatpush1.bf16.msra.mxu0 0
      %1759 = vmatprep.subr.bf16.mxu0 0
      %1760 = vmatpush1.bf16.msra.mxu0 0
      %1761 = vmatprep.mubr.bf16.mxu0 0
      %1762 = vmatmul.mubr.bf16.gmra.mrb[0].mxu0 %v644
      %v1763 = vpop.f32.mrb[0].mxu0
      %v1764 = vadd.f32 0.0, %v1763
      %v1765 = vpop.f32.mrb[0].mxu0
      %v1766 = vpop.f32.mrb[0].mxu0
      %v1767 = vadd.f32 0.0, %v1766
      %v1768 = vpop.f32.mrb[0].mxu0
      %1769 = vmatprep.mubr.bf16.mxu0 0
      %1770 = vmatmul.mubr.bf16.gmra.mrb[0].mxu0 %v647
      %v1771 = vpop.f32.mrb[0].mxu0
      %v1772 = vadd.f32 0.0, %v1771
      %v1773 = vpop.f32.mrb[0].mxu0
      %v1774 = vpop.f32.mrb[0].mxu0
      %v1775 = vadd.f32 0.0, %v1774
      %v1776 = vpop.f32.mrb[0].mxu0
      %1777 = vmatprep.mubr.bf16.mxu0 0
      %1778 = vmatmul.mubr.bf16.gmra.mrb[0].mxu0 %v650
      %v1779 = vpop.f32.mrb[0].mxu0
      %v1780 = vadd.f32 0.0, %v1779
      %v1781 = vpop.f32.mrb[0].mxu0
      %v1782 = vpop.f32.mrb[0].mxu0
      %v1783 = vadd.f32 0.0, %v1782
      %v1784 = vpop.f32.mrb[0].mxu0
      %1785 = vmatprep.mubr.bf16.mxu0 0
      %1786 = vmatmul.mubr.bf16.gmra.mrb[0].mxu0 %v653
      %v1787 = vpop.f32.mrb[0].mxu0
      %v1788 = vadd.f32 0.0, %v1787
      %v1789 = vpop.f32.mrb[0].mxu0
      %v1790 = vpop.f32.mrb[0].mxu0
      %v1791 = vadd.f32 0.0, %v1790
      %v1792 = vpop.f32.mrb[0].mxu0
      %1793 = vmatprep.mubr.bf16.mxu0 0
      %1794 = vmatmul.mubr.bf16.gmra.mrb[0].mxu0 %v656
      %v1795 = vpop.f32.mrb[0].mxu0
      %v1796 = vadd.f32 0.0, %v1795
      %v1797 = vpop.f32.mrb[0].mxu0
      %v1798 = vpop.f32.mrb[0].mxu0
      %v1799 = vadd.f32 0.0, %v1798
      %v1800 = vpop.f32.mrb[0].mxu0
      %1801 = vmatprep.mubr.bf16.mxu0 0
      %1802 = vmatmul.mubr.bf16.gmra.mrb[0].mxu0 %v659
      %v1803 = vpop.f32.mrb[0].mxu0
      %v1804 = vadd.f32 0.0, %v1803
      %v1805 = vpop.f32.mrb[0].mxu0
      %v1806 = vpop.f32.mrb[0].mxu0
      %v1807 = vadd.f32 0.0, %v1806
      %v1808 = vpop.f32.mrb[0].mxu0
      %1809 = vmatprep.mubr.bf16.mxu0 0
      %1810 = vmatmul.mubr.bf16.gmra.mrb[0].mxu0 %v1318
      %v1811 = vpop.f32.mrb[0].mxu0
      %v1812 = vadd.f32 0.0, %v1811
      %v1813 = vpop.f32.mrb[0].mxu0
      %v1814 = vpop.f32.mrb[0].mxu0
      %v1815 = vadd.f32 0.0, %v1814
      %v1816 = vpop.f32.mrb[0].mxu0
      %1817 = vmatprep.mubr.bf16.mxu0 0
      %1818 = vmatmul.mubr.bf16.gmra.mrb[0].mxu0 %v1724
      %v1819 = vpop.f32.mrb[0].mxu0
      %v1820 = vadd.f32 0.0, %v1819
      %v1821 = vpop.f32.mrb[0].mxu0
      %v1822 = vpop.f32.mrb[0].mxu0
      %v1823 = vadd.f32 0.0, %v1822
      %v1824 = vpop.f32.mrb[0].mxu0
      %1825 = vdwg.mxu0
      %v1826 = vadd.f32 %v1678, %v1764
      %v1827 = vadd.f32 %v1679, %v1767
      %v1828 = vadd.f32 %v1680, %v1772
      %v1829 = vadd.f32 %v1681, %v1775
      %v1830 = vadd.f32 %v1682, %v1780
      %v1831 = vadd.f32 %v1683, %v1783
      %v1832 = vadd.f32 %v1684, %v1788
      %v1833 = vadd.f32 %v1685, %v1791
      %v1834 = vadd.f32 %v1686, %v1796
      %v1835 = vadd.f32 %v1687, %v1799
      %v1836 = vadd.f32 %v1688, %v1804
      %v1837 = vadd.f32 %v1689, %v1807
      %v1838 = vadd.f32 %v1690, %v1812
      %v1839 = vadd.f32 %v1691, %v1815
      %v1840 = vadd.f32 %v1692, %v1820
      %v1841 = vadd.f32 %v1693, %v1823
      %v1843 = vrot.slane %v411, 5
      %v1844 = vrot.slane %v1843, 4
      %v1845 = vrot.slane %v412, 5
      %v1846 = vsel %vm939, %v1844, %v1845
      %v1847 = vrot.slane %v1845, 4
      %v1848 = vrot.slane %v413, 5
      %v1849 = vsel %vm939, %v1847, %v1848
      %s1850 = scalar_lea.vmem %s2, 16
      %v1851 = vld [vmem:[%s1850] sm:$0x3]
      %v1852 = vunpack.c.l.b16 %v1846
      %v1853 = vunpack.c.l.b16 %v1849
      %v1854 = vpack.c.b16 %v1853, %v1852
      %v1856 = vsel %vm636, %v1854, 0
      %v1859 = vand.u32 %v1851, %v664
      %1861 = vmatprep.subr.bf16.mxu0 0
      %1862 = vmatpush1.bf16.msra.mxu0 %v1859
      %1863 = vmatprep.subr.bf16.mxu0 0
      %1864 = vmatpush1.bf16.msra.mxu0 0
      %1865 = vmatprep.subr.bf16.mxu0 0
      %1866 = vmatpush1.bf16.msra.mxu0 0
      %1867 = vmatprep.subr.bf16.mxu0 0
      %1868 = vmatpush1.bf16.msra.mxu0 0
      %1869 = vmatprep.subr.bf16.mxu0 0
      %1870 = vmatpush1.bf16.msra.mxu0 0
      %1871 = vmatprep.subr.bf16.mxu0 0
      %1872 = vmatpush1.bf16.msra.mxu0 0
      %1873 = vmatprep.subr.bf16.mxu0 0
      %1874 = vmatpush1.bf16.msra.mxu0 0
      %1875 = vmatprep.subr.bf16.mxu0 0
      %1876 = vmatpush1.bf16.msra.mxu0 0
      %1877 = vmatprep.subr.bf16.mxu0 0
      %1878 = vmatpush1.bf16.msra.mxu0 0
      %1879 = vmatprep.subr.bf16.mxu0 0
      %1880 = vmatpush1.bf16.msra.mxu0 0
      %1881 = vmatprep.subr.bf16.mxu0 0
      %1882 = vmatpush1.bf16.msra.mxu0 0
      %1883 = vmatprep.subr.bf16.mxu0 0
      %1884 = vmatpush1.bf16.msra.mxu0 0
      %1885 = vmatprep.subr.bf16.mxu0 0
      %1886 = vmatpush1.bf16.msra.mxu0 0
      %1887 = vmatprep.subr.bf16.mxu0 0
      %1888 = vmatpush1.bf16.msra.mxu0 0
      %1889 = vmatprep.subr.bf16.mxu0 0
      %1890 = vmatpush1.bf16.msra.mxu0 0
      %1891 = vmatprep.subr.bf16.mxu0 0
      %1892 = vmatpush1.bf16.msra.mxu0 0
      %1893 = vmatprep.mubr.bf16.mxu0 0
      %1894 = vmatmul.mubr.bf16.gmra.mrb[0].mxu0 %v1029
      %v1895 = vpop.f32.mrb[0].mxu0
      %v1896 = vadd.f32 0.0, %v1895
      %v1897 = vpop.f32.mrb[0].mxu0
      %v1898 = vpop.f32.mrb[0].mxu0
      %v1899 = vadd.f32 0.0, %v1898
      %v1900 = vpop.f32.mrb[0].mxu0
      %1901 = vmatprep.mubr.bf16.mxu0 0
      %1902 = vmatmul.mubr.bf16.gmra.mrb[0].mxu0 %v1032
      %v1903 = vpop.f32.mrb[0].mxu0
      %v1904 = vadd.f32 0.0, %v1903
      %v1905 = vpop.f32.mrb[0].mxu0
      %v1906 = vpop.f32.mrb[0].mxu0
      %v1907 = vadd.f32 0.0, %v1906
      %v1908 = vpop.f32.mrb[0].mxu0
      %1909 = vmatprep.mubr.bf16.mxu0 0
      %1910 = vmatmul.mubr.bf16.gmra.mrb[0].mxu0 %v1035
      %v1911 = vpop.f32.mrb[0].mxu0
      %v1912 = vadd.f32 0.0, %v1911
      %v1913 = vpop.f32.mrb[0].mxu0
      %v1914 = vpop.f32.mrb[0].mxu0
      %v1915 = vadd.f32 0.0, %v1914
      %v1916 = vpop.f32.mrb[0].mxu0
      %1917 = vmatprep.mubr.bf16.mxu0 0
      %1918 = vmatmul.mubr.bf16.gmra.mrb[0].mxu0 %v1038
      %v1919 = vpop.f32.mrb[0].mxu0
      %v1920 = vadd.f32 0.0, %v1919
      %v1921 = vpop.f32.mrb[0].mxu0
      %v1922 = vpop.f32.mrb[0].mxu0
      %v1923 = vadd.f32 0.0, %v1922
      %v1924 = vpop.f32.mrb[0].mxu0
      %1925 = vmatprep.mubr.bf16.mxu0 0
      %1926 = vmatmul.mubr.bf16.gmra.mrb[0].mxu0 %v1041
      %v1927 = vpop.f32.mrb[0].mxu0
      %v1928 = vadd.f32 0.0, %v1927
      %v1929 = vpop.f32.mrb[0].mxu0
      %v1930 = vpop.f32.mrb[0].mxu0
      %v1931 = vadd.f32 0.0, %v1930
      %v1932 = vpop.f32.mrb[0].mxu0
      %1933 = vmatprep.mubr.bf16.mxu0 0
      %1934 = vmatmul.mubr.bf16.gmra.mrb[0].mxu0 %v1044
      %v1935 = vpop.f32.mrb[0].mxu0
      %v1936 = vadd.f32 0.0, %v1935
      %v1937 = vpop.f32.mrb[0].mxu0
      %v1938 = vpop.f32.mrb[0].mxu0
      %v1939 = vadd.f32 0.0, %v1938
      %v1940 = vpop.f32.mrb[0].mxu0
      %1941 = vmatprep.mubr.bf16.mxu0 0
      %1942 = vmatmul.mubr.bf16.gmra.mrb[0].mxu0 %v1450
      %v1943 = vpop.f32.mrb[0].mxu0
      %v1944 = vadd.f32 0.0, %v1943
      %v1945 = vpop.f32.mrb[0].mxu0
      %v1946 = vpop.f32.mrb[0].mxu0
      %v1947 = vadd.f32 0.0, %v1946
      %v1948 = vpop.f32.mrb[0].mxu0
      %1949 = vmatprep.mubr.bf16.mxu0 0
      %1950 = vmatmul.mubr.bf16.gmra.mrb[0].mxu0 %v1856
      %v1951 = vpop.f32.mrb[0].mxu0
      %v1952 = vadd.f32 0.0, %v1951
      %v1953 = vpop.f32.mrb[0].mxu0
      %v1954 = vpop.f32.mrb[0].mxu0
      %v1955 = vadd.f32 0.0, %v1954
      %v1956 = vpop.f32.mrb[0].mxu0
      %1957 = vdwg.mxu0
      %v1958 = vadd.f32 %v1826, %v1896
      %v1959 = vadd.f32 %v1827, %v1899
      %v1960 = vadd.f32 %v1828, %v1904
      %v1961 = vadd.f32 %v1829, %v1907
      %v1962 = vadd.f32 %v1830, %v1912
      %v1963 = vadd.f32 %v1831, %v1915
      %v1964 = vadd.f32 %v1832, %v1920
      %v1965 = vadd.f32 %v1833, %v1923
      %v1966 = vadd.f32 %v1834, %v1928
      %v1967 = vadd.f32 %v1835, %v1931
      %v1968 = vadd.f32 %v1836, %v1936
      %v1969 = vadd.f32 %v1837, %v1939
      %v1970 = vadd.f32 %v1838, %v1944
      %v1971 = vadd.f32 %v1839, %v1947
      %v1972 = vadd.f32 %v1840, %v1952
      %v1973 = vadd.f32 %v1841, %v1955
      %v1974 = vld [vmem:[%s3] sm:$0x1]
      %v1976 = vlaneseq
      %v1977 = vshrl.u32 %v1976, 7
      %v1978 = vsub.s32 0, %v1977
      %v1979 = vrot.slane %v1974, %v1978
      %v1981 = vadd.f32 %v1958, %v1979
      %v1982 = vadd.f32 %v1959, %v1979
      %v1983 = vadd.f32 %v1960, %v1979
      %v1984 = vadd.f32 %v1961, %v1979
      %v1985 = vadd.f32 %v1962, %v1979
      %v1986 = vadd.f32 %v1963, %v1979
      %v1987 = vadd.f32 %v1964, %v1979
      %v1988 = vadd.f32 %v1965, %v1979
      %v1989 = vadd.f32 %v1966, %v1979
      %v1990 = vadd.f32 %v1967, %v1979
      %v1991 = vadd.f32 %v1968, %v1979
      %v1992 = vadd.f32 %v1969, %v1979
      %v1993 = vadd.f32 %v1970, %v1979
      %v1994 = vadd.f32 %v1971, %v1979
      %v1995 = vadd.f32 %v1972, %v1979
      %v1996 = vadd.f32 %v1973, %v1979
      %v1997 = vmax.f32 %v1981, 0.0
      %v1998 = vmax.f32 %v1982, 0.0
      %v1999 = vmax.f32 %v1983, 0.0
      %v2000 = vmax.f32 %v1984, 0.0
      %v2001 = vmax.f32 %v1985, 0.0
      %v2002 = vmax.f32 %v1986, 0.0
      %v2003 = vmax.f32 %v1987, 0.0
      %v2004 = vmax.f32 %v1988, 0.0
      %v2005 = vmax.f32 %v1989, 0.0
      %v2006 = vmax.f32 %v1990, 0.0
      %v2007 = vmax.f32 %v1991, 0.0
      %v2008 = vmax.f32 %v1992, 0.0
      %v2009 = vmax.f32 %v1993, 0.0
      %v2010 = vmax.f32 %v1994, 0.0
      %v2011 = vmax.f32 %v1995, 0.0
      %v2012 = vmax.f32 %v1996, 0.0
      %v2013 = vpack.c.bf16 %v1998, %v1997
      %v2014 = vpack.c.bf16 %v2000, %v1999
      %v2015 = vpack.c.bf16 %v2002, %v2001
      %v2016 = vpack.c.bf16 %v2004, %v2003
      %v2017 = vpack.c.bf16 %v2006, %v2005
      %v2018 = vpack.c.bf16 %v2008, %v2007
      %v2019 = vpack.c.bf16 %v2010, %v2009
      %v2020 = vpack.c.bf16 %v2012, %v2011
      %v2029 = vunpack.c.l.b16 %v2013
      %v2030 = vunpack.c.h.b16 %v2013
      %v2031 = vunpack.c.l.b16 %v2014
      %v2032 = vunpack.c.h.b16 %v2014
      %v2033 = vunpack.c.l.b16 %v2015
      %v2034 = vunpack.c.h.b16 %v2015
      %v2035 = vunpack.c.l.b16 %v2016
      %v2036 = vunpack.c.h.b16 %v2016
      %v2037 = vunpack.c.l.b16 %v2017
      %v2038 = vunpack.c.h.b16 %v2017
      %v2039 = vunpack.c.l.b16 %v2018
      %v2040 = vunpack.c.h.b16 %v2018
      %v2041 = vunpack.c.l.b16 %v2019
      %v2042 = vunpack.c.h.b16 %v2019
      %v2043 = vunpack.c.l.b16 %v2020
      %v2044 = vunpack.c.h.b16 %v2020
      %v2045 = vpack.c.b16 %v2029, %v2029
      %v2046 = vpack.c.b16 %v2030, %v2030
      %v2047 = vpack.c.b16 %v2031, %v2031
      %v2048 = vpack.c.b16 %v2032, %v2032
      %v2049 = vpack.c.b16 %v2033, %v2033
      %v2050 = vpack.c.b16 %v2034, %v2034
      %v2051 = vpack.c.b16 %v2035, %v2035
      %v2052 = vpack.c.b16 %v2036, %v2036
      %v2053 = vpack.c.b16 %v2037, %v2037
      %v2054 = vpack.c.b16 %v2038, %v2038
      %v2055 = vpack.c.b16 %v2039, %v2039
      %v2056 = vpack.c.b16 %v2040, %v2040
      %v2057 = vpack.c.b16 %v2041, %v2041
      %v2058 = vpack.c.b16 %v2042, %v2042
      %v2059 = vpack.c.b16 %v2043, %v2043
      %v2060 = vpack.c.b16 %v2044, %v2044
      %vm2077 = vcmask 60416
      %2078 = vst.msk [vmem:[%s318] sm:$0xf] %vm2077, %v2045
      %2079 = vst.msk [vmem:[%s318 + $0x4] sm:$0xf] %vm2077, %v2046
      %2080 = vst.msk [vmem:[%s318 + $0x8] sm:$0xf] %vm2077, %v2047
      %2081 = vst.msk [vmem:[%s318 + $0xc] sm:$0xf] %vm2077, %v2048
      %2082 = vst.msk [vmem:[%s318 + $0x10] sm:$0xf] %vm2077, %v2049
      %2083 = vst.msk [vmem:[%s318 + $0x14] sm:$0xf] %vm2077, %v2050
      %2084 = vst.msk [vmem:[%s318 + $0x18] sm:$0xf] %vm2077, %v2051
      %2085 = vst.msk [vmem:[%s318 + $0x1c] sm:$0xf] %vm2077, %v2052
      %2086 = vst.msk [vmem:[%s318 + $0x20] sm:$0xf] %vm2077, %v2053
      %2087 = vst.msk [vmem:[%s318 + $0x24] sm:$0xf] %vm2077, %v2054
      %2088 = vst.msk [vmem:[%s318 + $0x28] sm:$0xf] %vm2077, %v2055
      %2089 = vst.msk [vmem:[%s318 + $0x2c] sm:$0xf] %vm2077, %v2056
      %2090 = vst.msk [vmem:[%s318 + $0x30] sm:$0xf] %vm2077, %v2057
      %2091 = vst.msk [vmem:[%s318 + $0x34] sm:$0xf] %vm2077, %v2058
      %2092 = vst.msk [vmem:[%s318 + $0x38] sm:$0xf] %vm2077, %v2059
      %2093 = vst.msk [vmem:[%s318 + $0x3c] sm:$0xf] %vm2077, %v2060
      %s2094 = smul.u32 8, %s20
      %p2095 = scmp.lt.s32.totalorder %s19, 1
      %s2096 = scalar_select %p2095, %s19, 1
      %p2097 = scmp.lt.s32.totalorder %s2094, 15
      %s2098 = scalar_select %p2097, %s2094, 15
      %s2099 = smul.addr %s2098, 2
      %s2100 = smul.addr %s2096, 32
      %s2101 = sadd.s32 %s2099, %s2100
      %s2102 = smul.addr %s2101, 4
      %s2103 = scalar_lea.vmem %s4, %s2102
      // Predicated region
      $region37: #{tpu_custom_call.1} parent=35 // pred_check
        %p2104 = pneg %p149
      $region38: #{tpu_custom_call.1} parent=35 // pred_check_branch
        %2106 = sbr.rel (%p2104) target = $region40
      $region39: #{tpu_custom_call.1} parent=35 // pred_region
        %s2107 = smul.u32 8, %s20
      $region40: #{tpu_custom_call.1} parent=35 // pred_fallthru
        _
    $region36: #{tpu_custom_call.1} parent=5 // pred_fallthru
      _
    %p2108 = scmp.le.s32.totalorder 2, %s10
    // Predicated region
    $region41: #{tpu_custom_call.1} parent=5 // pred_check
      %p2109 = pneg %p2108
    $region42: #{tpu_custom_call.1} parent=5 // pred_check_branch
      %2111 = sbr.rel (%p2109) target = $region44
    $region43: #{tpu_custom_call.1} parent=5 // pred_region
      %s2112 = ssub.s32 %s10, 2
      // Predicated region
      $region45: #{tpu_custom_call.1} parent=43 // pred_check
        %p2113 = pneg %p155
      $region46: #{tpu_custom_call.1} parent=43 // pred_check_branch
        %2115 = sbr.rel (%p2113) target = $region48
      $region47: #{tpu_custom_call.1} parent=43 // pred_region
        %s2116 = smul.u32 8, %s22
        %p2117 = scmp.lt.s32.totalorder %s21, 1
        %s2118 = scalar_select %p2117, %s21, 1
        %p2119 = scmp.lt.s32.totalorder %s2116, 15
        %s2120 = scalar_select %p2119, %s2116, 15
        %s2121 = smul.addr %s2120, 2
        %s2122 = smul.addr %s2118, 32
        %s2123 = sadd.s32 %s2121, %s2122
        %s2124 = smul.addr %s2123, 4
        %s2125 = scalar_lea.vmem %s4, %s2124
      $region48: #{tpu_custom_call.1} parent=43 // pred_fallthru
        _
    $region44: #{tpu_custom_call.1} parent=5 // pred_fallthru
      _
  $region6: #{tpu_custom_call.1} parent=0 // loop_footer
    %s14 = sadd.s32 1, %s10
  $region7: #{tpu_custom_call.1} parent=0 // loop_footer_branch
    %9 = sbr.rel target = $region3
  $region8: #{tpu_custom_call.1} parent=0 // loop_exit
    _

</llo_original>
